<compile_context>
chip_gen: v5e
topology: v5e:2x2
jax: 0.10.0
libtpu: 0.0.40
codegen_flags: <defaults>
</compile_context>

<pallas_src>
import jax
import jax.numpy as jnp
from jax import lax
from jax.experimental import pallas as pl
from jax.experimental.pallas import tpu as pltpu


def fold_bn(gamma, beta, mean, var, eps=1e-5):
    scale = gamma / jnp.sqrt(var + eps)
    bias = beta - mean * scale
    return scale, bias


def double_conv(x_nchw, params, *, compute_dtype=jnp.bfloat16, row_block=8,
                eps=1e-5):
    """Fused DoubleConv forward: (N, Cin, H, W) -> (N, Cout, H, W) in f32."""
    N, Cin, H, W = x_nchw.shape
    Cout = params["w1"].shape[-1]

    # ---------------- wrapper glue (cheap, once per call) ----------------
    x = jnp.transpose(x_nchw, (0, 2, 3, 1)).astype(compute_dtype)   # NHWC
    # Zero padding for BOTH convs done up front: rows +-2, cols +-1.
    xp = jnp.pad(x, ((0, 0), (2, 2), (1, 1), (0, 0)))   # (N, H+4, W+2, Cin)

    s1, b1 = fold_bn(params["gamma1"], params["beta1"],
                     params["mean1"], params["var1"], eps)
    s2, b2 = fold_bn(params["gamma2"], params["beta2"],
                     params["mean2"], params["var2"], eps)
    # Fold BN scale into the HWIO weights; reshape to (9*C, Cout) so tap
    # t = dy*3+dx occupies rows [t*C, (t+1)*C).
    w1 = (params["w1"] * s1[None, None, None, :]) \
        .reshape(9 * Cin, Cout).astype(compute_dtype)
    w2 = (params["w2"] * s2[None, None, None, :]) \
        .reshape(9 * Cout, Cout).astype(compute_dtype)
    b1 = b1.reshape(1, Cout).astype(jnp.float32)
    b2 = b2.reshape(1, Cout).astype(jnp.float32)

    # ---------------- tiling choices ----------------
    TH = row_block if (0 < row_block <= H and H % row_block == 0) else H
    n_rt = H // TH
    use_im2col = max(Cin, Cout) <= 64   # shallow channels -> pack K = 9*C

    def conv3x3(tap, w_ref, rows, cin):
        """3x3 conv as MXU matmul(s); tap(dy, dx) -> (rows, W, cin) value."""
        if use_im2col:
            patches = jnp.concatenate(
                [tap(dy, dx) for dy in range(3) for dx in range(3)], axis=-1)
            lhs = patches.reshape(rows * W, 9 * cin)
            return jnp.dot(lhs, w_ref[...],
                           preferred_element_type=jnp.float32)
        cout = w_ref.shape[-1]
        acc = jnp.zeros((rows * W, cout), jnp.float32)
        for t in range(9):
            dy, dx = divmod(t, 3)
            lhs = tap(dy, dx).reshape(rows * W, cin)
            acc = acc + jnp.dot(lhs, w_ref[t * cin:(t + 1) * cin, :],
                                preferred_element_type=jnp.float32)
        return acc   # (rows*W, Cout) f32

    # ---------------- the fused kernel ----------------
    def kernel(x_ref, w1_ref, b1_ref, w2_ref, b2_ref, o_ref, h_ref):
        r = pl.program_id(1)
        row0 = pl.multiple_of(r * TH, TH)   # window start (padded row coords)

        # --- conv1 + BN bias + ReLU over a (TH+2)-row slab (1-row halo).
        def tap1(dy, dx):
            return x_ref[pl.ds(row0 + dy, TH + 2), dx:dx + W, :]

        acc1 = conv3x3(tap1, w1_ref, TH + 2, Cin)
        y1 = jnp.maximum(acc1 + b1_ref[...], 0.0)          # f32 epilogue
        y1 = y1.reshape(TH + 2, W, Cout).astype(compute_dtype)

        # h slab: (TH+2, W+2, Cout) with zero border columns.  Rows of h that
        # fall outside the image are conv2's zero padding, not conv1 output.
        h_ref[:, 1:W + 1, :] = y1
        h_ref[:, 0:1, :] = jnp.zeros((TH + 2, 1, Cout), compute_dtype)
        h_ref[:, W + 1:W + 2, :] = jnp.zeros((TH + 2, 1, Cout), compute_dtype)

        @pl.when(r == 0)
        def _():
            h_ref[0, :, :] = jnp.zeros((W + 2, Cout), compute_dtype)

        @pl.when(r == n_rt - 1)
        def _():
            h_ref[TH + 1, :, :] = jnp.zeros((W + 2, Cout), compute_dtype)

        # --- conv2 + BN bias + ReLU -> output tile.
        def tap2(dy, dx):
            return h_ref[dy:dy + TH, dx:dx + W, :]

        acc2 = conv3x3(tap2, w2_ref, TH, Cout)
        y2 = jnp.maximum(acc2 + b2_ref[...], 0.0)
        o_ref[...] = y2.reshape(TH, W, Cout).astype(o_ref.dtype)

    # ---------------- specs, scratch, VMEM budget ----------------
    in_specs = [
        # Whole padded image resident per batch item (fetched once per n,
        # reused across row tiles since the index map ignores r).
        pl.BlockSpec((None, H + 4, W + 2, Cin), lambda n, r: (n, 0, 0, 0)),
        pl.BlockSpec((9 * Cin, Cout), lambda n, r: (0, 0)),     # w1 (resident)
        pl.BlockSpec((1, Cout), lambda n, r: (0, 0)),           # b1
        pl.BlockSpec((9 * Cout, Cout), lambda n, r: (0, 0)),    # w2 (resident)
        pl.BlockSpec((1, Cout), lambda n, r: (0, 0)),           # b2
    ]
    out_specs = pl.BlockSpec((None, TH, W, Cout), lambda n, r: (n, r, 0, 0))
    scratch = [pltpu.VMEM((TH + 2, W + 2, Cout), compute_dtype)]   # h slab

    bpe = jnp.dtype(compute_dtype).itemsize
    est = (2 * (H + 4) * (W + 2) * Cin * bpe            # padded input (x2 buf)
           + 2 * TH * W * Cout * 4                      # output tile (f32)
           + 2 * (9 * Cin + 9 * Cout) * Cout * bpe      # weights
           + 4 * Cout * 4                               # biases
           + (TH + 2) * (W + 2) * Cout * bpe            # h slab
           + (TH + 2) * W * 9 * max(Cin, Cout) * bpe)   # live im2col value
    vmem_limit = int(min(max(4 * est, 32 * 2 ** 20), 64 * 2 ** 20))

    y = pl.pallas_call(
        kernel,
        out_shape=jax.ShapeDtypeStruct((N, H, W, Cout), jnp.float32),
        grid_spec=pltpu.PrefetchScalarGridSpec(
            num_scalar_prefetch=0,
            grid=(N, n_rt),
            in_specs=in_specs,
            out_specs=out_specs,
            scratch_shapes=scratch),
        compiler_params=pltpu.CompilerParams(
            dimension_semantics=("parallel", "parallel"),
            vmem_limit_bytes=vmem_limit),
    )(xp, w1, b1, w2, b2)

    return jnp.transpose(y, (0, 3, 1, 2))   # NHWC -> NCHW


# ---------------------------------------------------------------------------
# Parameters + pure-JAX reference
# ---------------------------------------------------------------------------
def init_params(key, in_channels, out_channels):
    k1, k2, k3, k4 = jax.random.split(key, 4)
    return {
        "w1": 0.1 * jax.random.normal(k1, (3, 3, in_channels, out_channels),
                                      jnp.float32),
        "w2": 0.1 * jax.random.normal(k2, (3, 3, out_channels, out_channels),
                                      jnp.float32),
        "gamma1": 1.0 + 0.05 * jax.random.normal(k3, (out_channels,), jnp.float32),
        "beta1": jnp.linspace(-0.1, 0.1, out_channels, dtype=jnp.float32),
        "mean1": 0.01 * jnp.arange(out_channels, dtype=jnp.float32),
        "var1": jnp.ones((out_channels,), jnp.float32),
        "gamma2": 1.0 + 0.05 * jax.random.normal(k4, (out_channels,), jnp.float32),
        "beta2": jnp.linspace(0.1, -0.1, out_channels, dtype=jnp.float32),
        "mean2": 0.02 * jnp.arange(out_channels, dtype=jnp.float32),
        "var2": 1.1 * jnp.ones((out_channels,), jnp.float32),
    }


def reference_double_conv(x_nchw, params, eps=1e-5):
    """f32 reference: conv -> BN(eval) -> ReLU, twice (lax.conv, highest prec)."""
    def conv(x, w):
        return lax.conv_general_dilated(
            x, w, window_strides=(1, 1), padding="SAME",
            dimension_numbers=("NCHW", "HWIO", "NCHW"),
            precision=lax.Precision.HIGHEST)

    def bn_relu(x, gamma, beta, mean, var):
        s = (gamma / jnp.sqrt(var + eps))[None, :, None, None]
        b = (beta - mean * gamma / jnp.sqrt(var + eps))[None, :, None, None]
        return jnp.maximum(x * s + b, 0.0)

    h = bn_relu(conv(x_nchw, params["w1"]), params["gamma1"], params["beta1"],
                params["mean1"], params["var1"])
    return bn_relu(conv(h, params["w2"]), params["gamma2"], params["beta2"],
                   params["mean2"], params["var2"])


if __name__ == "__main__":
    key = jax.random.PRNGKey(0)
    kx, kp = jax.random.split(key)

    N, Cin, Cout, H, W = 2, 4, 8, 16, 16
    x = jax.random.normal(kx, (N, Cin, H, W), jnp.float32)
    params = init_params(kp, Cin, Cout)

    ref = reference_double_conv(x, params)

    # 1) f32 path (strict-ish check; also exercises the 2-row-tile halo logic).
    out_f32 = jax.block_until_ready(
        double_conv(x, params, compute_dtype=jnp.float32, row_block=8))
    assert out_f32.shape == (N, Cout, H, W), out_f32.shape
    err_f32 = float(jnp.max(jnp.abs(out_f32 - ref)))
    assert err_f32 < 5e-3, err_f32

    # 2) bf16 I/O path (default; halves activation/weight HBM traffic).
    out_bf16 = jax.block_until_ready(
        double_conv(x, params, compute_dtype=jnp.bfloat16, row_block=8))
    assert out_bf16.shape == (N, Cout, H, W), out_bf16.shape
    err_bf16 = float(jnp.max(jnp.abs(out_bf16 - ref)))
    assert err_bf16 < 1e-1, err_bf16

    print("KERNEL_OK")
</pallas_src>

<mosaic_0001>
module attributes {stable_mosaic.version = 11 : i64} {
  func.func @kernel(%arg0: i32, %arg1: i32, %arg2: memref<1x20x18x4xf32, #tpu.memory_space<vmem>>, %arg3: memref<36x8xf32, #tpu.memory_space<vmem>>, %arg4: memref<1x8xf32, #tpu.memory_space<vmem>>, %arg5: memref<72x8xf32, #tpu.memory_space<vmem>>, %arg6: memref<1x8xf32, #tpu.memory_space<vmem>>, %arg7: memref<1x8x16x8xf32, #tpu.memory_space<vmem>>, %arg8: memref<10x18x8xf32, #tpu.memory_space<vmem>>) attributes {dimension_semantics = [#tpu.dimension_semantics<parallel>, #tpu.dimension_semantics<parallel>], iteration_bounds = array<i64: 2, 2>, scalar_prefetch = 0 : i64, scratch_operands = 1 : i64, tpu.core_type = #tpu.core_type<tc>, window_params = [{transform_indices = @transform_0, window_bounds = array<i64: 1, 20, 18, 4>}, {pipeline_mode = #tpu.pipeline_mode<synchronous>, transform_indices = @transform_1, window_bounds = array<i64: 36, 8>}, {pipeline_mode = #tpu.pipeline_mode<synchronous>, transform_indices = @transform_2, window_bounds = array<i64: 1, 8>}, {pipeline_mode = #tpu.pipeline_mode<synchronous>, transform_indices = @transform_3, window_bounds = array<i64: 72, 8>}, {pipeline_mode = #tpu.pipeline_mode<synchronous>, transform_indices = @transform_4, window_bounds = array<i64: 1, 8>}, {transform_indices = @transform_5, window_bounds = array<i64: 1, 8, 16, 8>}]} {
    %c8_i32 = arith.constant 8 : i32
    %0 = arith.muli %arg1, %c8_i32 : i32
    %1 = tpu.assume_multiple %0, 8 : i32
    %c0_i32 = arith.constant 0 : i32
    %2 = arith.addi %1, %c0_i32 : i32
    %c0 = arith.constant 0 : index
    %3 = arith.index_cast %2 : i32 to index
    %c0_0 = arith.constant 0 : index
    %c0_1 = arith.constant 0 : index
    %4 = vector.load %arg2[%c0, %3, %c0_0, %c0_1] : memref<1x20x18x4xf32, #tpu.memory_space<vmem>>, vector<1x10x16x4xf32>
    %5 = vector.shape_cast %4 : vector<1x10x16x4xf32> to vector<10x16x4xf32>
    %c0_i32_2 = arith.constant 0 : i32
    %6 = arith.addi %1, %c0_i32_2 : i32
    %c0_3 = arith.constant 0 : index
    %7 = arith.index_cast %6 : i32 to index
    %c1 = arith.constant 1 : index
    %c0_4 = arith.constant 0 : index
    %8 = vector.load %arg2[%c0_3, %7, %c1, %c0_4] : memref<1x20x18x4xf32, #tpu.memory_space<vmem>>, vector<1x10x16x4xf32>
    %9 = vector.shape_cast %8 : vector<1x10x16x4xf32> to vector<10x16x4xf32>
    %c0_i32_5 = arith.constant 0 : i32
    %10 = arith.addi %1, %c0_i32_5 : i32
    %c0_6 = arith.constant 0 : index
    %11 = arith.index_cast %10 : i32 to index
    %c2 = arith.constant 2 : index
    %c0_7 = arith.constant 0 : index
    %12 = vector.load %arg2[%c0_6, %11, %c2, %c0_7] : memref<1x20x18x4xf32, #tpu.memory_space<vmem>>, vector<1x10x16x4xf32>
    %13 = vector.shape_cast %12 : vector<1x10x16x4xf32> to vector<10x16x4xf32>
    %c1_i32 = arith.constant 1 : i32
    %14 = arith.addi %1, %c1_i32 : i32
    %c0_8 = arith.constant 0 : index
    %15 = arith.index_cast %14 : i32 to index
    %c0_9 = arith.constant 0 : index
    %c0_10 = arith.constant 0 : index
    %16 = vector.load %arg2[%c0_8, %15, %c0_9, %c0_10] : memref<1x20x18x4xf32, #tpu.memory_space<vmem>>, vector<1x10x16x4xf32>
    %17 = vector.shape_cast %16 : vector<1x10x16x4xf32> to vector<10x16x4xf32>
    %c1_i32_11 = arith.constant 1 : i32
    %18 = arith.addi %1, %c1_i32_11 : i32
    %c0_12 = arith.constant 0 : index
    %19 = arith.index_cast %18 : i32 to index
    %c1_13 = arith.constant 1 : index
    %c0_14 = arith.constant 0 : index
    %20 = vector.load %arg2[%c0_12, %19, %c1_13, %c0_14] : memref<1x20x18x4xf32, #tpu.memory_space<vmem>>, vector<1x10x16x4xf32>
    %21 = vector.shape_cast %20 : vector<1x10x16x4xf32> to vector<10x16x4xf32>
    %c1_i32_15 = arith.constant 1 : i32
    %22 = arith.addi %1, %c1_i32_15 : i32
    %c0_16 = arith.constant 0 : index
    %23 = arith.index_cast %22 : i32 to index
    %c2_17 = arith.constant 2 : index
    %c0_18 = arith.constant 0 : index
    %24 = vector.load %arg2[%c0_16, %23, %c2_17, %c0_18] : memref<1x20x18x4xf32, #tpu.memory_space<vmem>>, vector<1x10x16x4xf32>
    %25 = vector.shape_cast %24 : vector<1x10x16x4xf32> to vector<10x16x4xf32>
    %c2_i32 = arith.constant 2 : i32
    %26 = arith.addi %1, %c2_i32 : i32
    %c0_19 = arith.constant 0 : index
    %27 = arith.index_cast %26 : i32 to index
    %c0_20 = arith.constant 0 : index
    %c0_21 = arith.constant 0 : index
    %28 = vector.load %arg2[%c0_19, %27, %c0_20, %c0_21] : memref<1x20x18x4xf32, #tpu.memory_space<vmem>>, vector<1x10x16x4xf32>
    %29 = vector.shape_cast %28 : vector<1x10x16x4xf32> to vector<10x16x4xf32>
    %c2_i32_22 = arith.constant 2 : i32
    %30 = arith.addi %1, %c2_i32_22 : i32
    %c0_23 = arith.constant 0 : index
    %31 = arith.index_cast %30 : i32 to index
    %c1_24 = arith.constant 1 : index
    %c0_25 = arith.constant 0 : index
    %32 = vector.load %arg2[%c0_23, %31, %c1_24, %c0_25] : memref<1x20x18x4xf32, #tpu.memory_space<vmem>>, vector<1x10x16x4xf32>
    %33 = vector.shape_cast %32 : vector<1x10x16x4xf32> to vector<10x16x4xf32>
    %c2_i32_26 = arith.constant 2 : i32
    %34 = arith.addi %1, %c2_i32_26 : i32
    %c0_27 = arith.constant 0 : index
    %35 = arith.index_cast %34 : i32 to index
    %c2_28 = arith.constant 2 : index
    %c0_29 = arith.constant 0 : index
    %36 = vector.load %arg2[%c0_27, %35, %c2_28, %c0_29] : memref<1x20x18x4xf32, #tpu.memory_space<vmem>>, vector<1x10x16x4xf32>
    %37 = vector.shape_cast %36 : vector<1x10x16x4xf32> to vector<10x16x4xf32>
    %38 = tpu.concatenate %5, %9, %13, %17, %21, %25, %29, %33, %37 in 2 : vector<10x16x4xf32>, vector<10x16x4xf32>, vector<10x16x4xf32>, vector<10x16x4xf32>, vector<10x16x4xf32>, vector<10x16x4xf32>, vector<10x16x4xf32>, vector<10x16x4xf32>, vector<10x16x4xf32> -> vector<10x16x36xf32>
    %39 = vector.shape_cast %38 : vector<10x16x36xf32> to vector<160x36xf32>
    %c0_30 = arith.constant 0 : index
    %c0_31 = arith.constant 0 : index
    %40 = vector.load %arg3[%c0_30, %c0_31] : memref<36x8xf32, #tpu.memory_space<vmem>>, vector<36x8xf32>
    %cst = arith.constant dense<0.000000e+00> : vector<160x8xf32>
    %41 = tpu.matmul %39, %40, %cst {dimension_numbers = #tpu.dot_dimension_numbers<[1], [0], [0], [1], [0, 0, 1, 1], [], []>} : vector<160x36xf32>, vector<36x8xf32>, vector<160x8xf32> -> vector<160x8xf32>
    %c0_32 = arith.constant 0 : index
    %c0_33 = arith.constant 0 : index
    %42 = vector.load %arg4[%c0_32, %c0_33] : memref<1x8xf32, #tpu.memory_space<vmem>>, vector<1x8xf32>
    %43 = vector.broadcast %42 : vector<1x8xf32> to vector<160x8xf32>
    %44 = arith.addf %41, %43 : vector<160x8xf32>
    %cst_34 = arith.constant 0.000000e+00 : f32
    %45 = vector.broadcast %cst_34 : f32 to vector<160x8xf32>
    %46 = arith.maximumf %44, %45 : vector<160x8xf32>
    %47 = vector.shape_cast %46 : vector<160x8xf32> to vector<10x16x8xf32>
    %c0_35 = arith.constant 0 : index
    %c1_36 = arith.constant 1 : index
    %c0_37 = arith.constant 0 : index
    %48 = vector.load %arg8[%c0_35, %c1_36, %c0_37] : memref<10x18x8xf32, #tpu.memory_space<vmem>>, vector<10x16x8xf32>
    tpu.vector_store %arg8[%c0_35, %c1_36, %c0_37], %47 {strides = array<i32>} : memref<10x18x8xf32, #tpu.memory_space<vmem>>, vector<10x16x8xf32>,
    %cst_38 = arith.constant 0.000000e+00 : f32
    %49 = vector.broadcast %cst_38 : f32 to vector<10x1x8xf32>
    %c0_39 = arith.constant 0 : index
    %c0_40 = arith.constant 0 : index
    %c0_41 = arith.constant 0 : index
    %50 = vector.load %arg8[%c0_39, %c0_40, %c0_41] : memref<10x18x8xf32, #tpu.memory_space<vmem>>, vector<10x1x8xf32>
    tpu.vector_store %arg8[%c0_39, %c0_40, %c0_41], %49 {strides = array<i32>} : memref<10x18x8xf32, #tpu.memory_space<vmem>>, vector<10x1x8xf32>,
    %cst_42 = arith.constant 0.000000e+00 : f32
    %51 = vector.broadcast %cst_42 : f32 to vector<10x1x8xf32>
    %c0_43 = arith.constant 0 : index
    %c17 = arith.constant 17 : index
    %c0_44 = arith.constant 0 : index
    %52 = vector.load %arg8[%c0_43, %c17, %c0_44] : memref<10x18x8xf32, #tpu.memory_space<vmem>>, vector<10x1x8xf32>
    tpu.vector_store %arg8[%c0_43, %c17, %c0_44], %51 {strides = array<i32>} : memref<10x18x8xf32, #tpu.memory_space<vmem>>, vector<10x1x8xf32>,
    %c0_i32_45 = arith.constant 0 : i32
    %53 = arith.cmpi eq, %arg1, %c0_i32_45 : i32
    %54 = arith.extui %53 : i1 to i32
    %c0_i32_46 = arith.constant 0 : i32
    %55 = arith.cmpi ne, %54, %c0_i32_46 : i32
    scf.if %55 {
      %cst_86 = arith.constant 0.000000e+00 : f32
      %81 = vector.broadcast %cst_86 : f32 to vector<18x8xf32>
      %c0_87 = arith.constant 0 : index
      %c0_88 = arith.constant 0 : index
      %c0_89 = arith.constant 0 : index
      %82 = vector.load %arg8[%c0_87, %c0_88, %c0_89] : memref<10x18x8xf32, #tpu.memory_space<vmem>>, vector<1x18x8xf32>
      %83 = vector.shape_cast %82 : vector<1x18x8xf32> to vector<18x8xf32>
      %84 = vector.shape_cast %81 : vector<18x8xf32> to vector<1x18x8xf32>
      tpu.vector_store %arg8[%c0_87, %c0_88, %c0_89], %84 {strides = array<i32>} : memref<10x18x8xf32, #tpu.memory_space<vmem>>, vector<1x18x8xf32>,
    } else {
    }
    %c1_i32_47 = arith.constant 1 : i32
    %56 = arith.cmpi eq, %arg1, %c1_i32_47 : i32
    %57 = arith.extui %56 : i1 to i32
    %c0_i32_48 = arith.constant 0 : i32
    %58 = arith.cmpi ne, %57, %c0_i32_48 : i32
    scf.if %58 {
      %cst_86 = arith.constant 0.000000e+00 : f32
      %81 = vector.broadcast %cst_86 : f32 to vector<18x8xf32>
      %c9 = arith.constant 9 : index
      %c0_87 = arith.constant 0 : index
      %c0_88 = arith.constant 0 : index
      %82 = vector.load %arg8[%c9, %c0_87, %c0_88] : memref<10x18x8xf32, #tpu.memory_space<vmem>>, vector<1x18x8xf32>
      %83 = vector.shape_cast %82 : vector<1x18x8xf32> to vector<18x8xf32>
      %84 = vector.shape_cast %81 : vector<18x8xf32> to vector<1x18x8xf32>
      tpu.vector_store %arg8[%c9, %c0_87, %c0_88], %84 {strides = array<i32>} : memref<10x18x8xf32, #tpu.memory_space<vmem>>, vector<1x18x8xf32>,
    } else {
    }
    %c0_49 = arith.constant 0 : index
    %c0_50 = arith.constant 0 : index
    %c0_51 = arith.constant 0 : index
    %59 = vector.load %arg8[%c0_49, %c0_50, %c0_51] : memref<10x18x8xf32, #tpu.memory_space<vmem>>, vector<8x16x8xf32>
    %c0_52 = arith.constant 0 : index
    %c1_53 = arith.constant 1 : index
    %c0_54 = arith.constant 0 : index
    %60 = vector.load %arg8[%c0_52, %c1_53, %c0_54] : memref<10x18x8xf32, #tpu.memory_space<vmem>>, vector<8x16x8xf32>
    %c0_55 = arith.constant 0 : index
    %c2_56 = arith.constant 2 : index
    %c0_57 = arith.constant 0 : index
    %61 = vector.load %arg8[%c0_55, %c2_56, %c0_57] : memref<10x18x8xf32, #tpu.memory_space<vmem>>, vector<8x16x8xf32>
    %c1_58 = arith.constant 1 : index
    %c0_59 = arith.constant 0 : index
    %c0_60 = arith.constant 0 : index
    %62 = vector.load %arg8[%c1_58, %c0_59, %c0_60] : memref<10x18x8xf32, #tpu.memory_space<vmem>>, vector<8x16x8xf32>
    %c1_61 = arith.constant 1 : index
    %c1_62 = arith.constant 1 : index
    %c0_63 = arith.constant 0 : index
    %63 = vector.load %arg8[%c1_61, %c1_62, %c0_63] : memref<10x18x8xf32, #tpu.memory_space<vmem>>, vector<8x16x8xf32>
    %c1_64 = arith.constant 1 : index
    %c2_65 = arith.constant 2 : index
    %c0_66 = arith.constant 0 : index
    %64 = vector.load %arg8[%c1_64, %c2_65, %c0_66] : memref<10x18x8xf32, #tpu.memory_space<vmem>>, vector<8x16x8xf32>
    %c2_67 = arith.constant 2 : index
    %c0_68 = arith.constant 0 : index
    %c0_69 = arith.constant 0 : index
    %65 = vector.load %arg8[%c2_67, %c0_68, %c0_69] : memref<10x18x8xf32, #tpu.memory_space<vmem>>, vector<8x16x8xf32>
    %c2_70 = arith.constant 2 : index
    %c1_71 = arith.constant 1 : index
    %c0_72 = arith.constant 0 : index
    %66 = vector.load %arg8[%c2_70, %c1_71, %c0_72] : memref<10x18x8xf32, #tpu.memory_space<vmem>>, vector<8x16x8xf32>
    %c2_73 = arith.constant 2 : index
    %c2_74 = arith.constant 2 : index
    %c0_75 = arith.constant 0 : index
    %67 = vector.load %arg8[%c2_73, %c2_74, %c0_75] : memref<10x18x8xf32, #tpu.memory_space<vmem>>, vector<8x16x8xf32>
    %68 = tpu.concatenate %59, %60, %61, %62, %63, %64, %65, %66, %67 in 2 : vector<8x16x8xf32>, vector<8x16x8xf32>, vector<8x16x8xf32>, vector<8x16x8xf32>, vector<8x16x8xf32>, vector<8x16x8xf32>, vector<8x16x8xf32>, vector<8x16x8xf32>, vector<8x16x8xf32> -> vector<8x16x72xf32>
    %69 = vector.shape_cast %68 : vector<8x16x72xf32> to vector<128x72xf32>
    %c0_76 = arith.constant 0 : index
    %c0_77 = arith.constant 0 : index
    %70 = vector.load %arg5[%c0_76, %c0_77] : memref<72x8xf32, #tpu.memory_space<vmem>>, vector<72x8xf32>
    %cst_78 = arith.constant dense<0.000000e+00> : vector<128x8xf32>
    %71 = tpu.matmul %69, %70, %cst_78 {dimension_numbers = #tpu.dot_dimension_numbers<[1], [0], [0], [1], [0, 0, 1, 1], [], []>} : vector<128x72xf32>, vector<72x8xf32>, vector<128x8xf32> -> vector<128x8xf32>
    %c0_79 = arith.constant 0 : index
    %c0_80 = arith.constant 0 : index
    %72 = vector.load %arg6[%c0_79, %c0_80] : memref<1x8xf32, #tpu.memory_space<vmem>>, vector<1x8xf32>
    %73 = vector.broadcast %72 : vector<1x8xf32> to vector<128x8xf32>
    %74 = arith.addf %71, %73 : vector<128x8xf32>
    %cst_81 = arith.constant 0.000000e+00 : f32
    %75 = vector.broadcast %cst_81 : f32 to vector<128x8xf32>
    %76 = arith.maximumf %74, %75 : vector<128x8xf32>
    %77 = vector.shape_cast %76 : vector<128x8xf32> to vector<8x16x8xf32>
    %c0_82 = arith.constant 0 : index
    %c0_83 = arith.constant 0 : index
    %c0_84 = arith.constant 0 : index
    %c0_85 = arith.constant 0 : index
    %78 = vector.load %arg7[%c0_82, %c0_83, %c0_84, %c0_85] : memref<1x8x16x8xf32, #tpu.memory_space<vmem>>, vector<1x8x16x8xf32>
    %79 = vector.shape_cast %78 : vector<1x8x16x8xf32> to vector<8x16x8xf32>
    %80 = vector.shape_cast %77 : vector<8x16x8xf32> to vector<1x8x16x8xf32>
    tpu.vector_store %arg7[%c0_82, %c0_83, %c0_84, %c0_85], %80 {strides = array<i32>} : memref<1x8x16x8xf32, #tpu.memory_space<vmem>>, vector<1x8x16x8xf32>,
    return
  }
  func.func @transform_0(%arg0: i32, %arg1: i32) -> (i32, i32, i32, i32) {
    %c0_i32 = arith.constant 0 : i32
    %c0_i32_0 = arith.constant 0 : i32
    %c0_i32_1 = arith.constant 0 : i32
    %c0_i32_2 = arith.constant 0 : i32
    return %arg0, %c0_i32, %c0_i32_0, %c0_i32_1 : i32, i32, i32, i32
  }
  func.func @transform_1(%arg0: i32, %arg1: i32) -> (i32, i32) {
    %c0_i32 = arith.constant 0 : i32
    %c0_i32_0 = arith.constant 0 : i32
    %c0_i32_1 = arith.constant 0 : i32
    return %c0_i32, %c0_i32_0 : i32, i32
  }
  func.func @transform_2(%arg0: i32, %arg1: i32) -> (i32, i32) {
    %c0_i32 = arith.constant 0 : i32
    %c0_i32_0 = arith.constant 0 : i32
    %c0_i32_1 = arith.constant 0 : i32
    return %c0_i32, %c0_i32_0 : i32, i32
  }
  func.func @transform_3(%arg0: i32, %arg1: i32) -> (i32, i32) {
    %c0_i32 = arith.constant 0 : i32
    %c0_i32_0 = arith.constant 0 : i32
    %c0_i32_1 = arith.constant 0 : i32
    return %c0_i32, %c0_i32_0 : i32, i32
  }
  func.func @transform_4(%arg0: i32, %arg1: i32) -> (i32, i32) {
    %c0_i32 = arith.constant 0 : i32
    %c0_i32_0 = arith.constant 0 : i32
    %c0_i32_1 = arith.constant 0 : i32
    return %c0_i32, %c0_i32_0 : i32, i32
  }
  func.func @transform_5(%arg0: i32, %arg1: i32) -> (i32, i32, i32, i32) {
    %c0_i32 = arith.constant 0 : i32
    %c0_i32_0 = arith.constant 0 : i32
    %c0_i32_1 = arith.constant 0 : i32
    return %arg0, %arg1, %c0_i32, %c0_i32_0 : i32, i32, i32, i32
  }
}

</mosaic_0001>

<llo_original>
// kernel: tpu_custom_call.1
$region0: #{tpu_custom_call.1}
  #allocation0 [shape = 'u32[]', space=smem, size = 0x4, offset = 0x4, fixed_abs, tag = 'smem constant byte address 0x4 - core index']
  #allocation1 [shape = 'u32[72,128]{1,0:T(1,128)}', space=vmem, size = 0x9000, scoped, tag = 'internal scratch']
  #allocation2 [shape = 'f32[10,18,8]{2,1,0:T(8,128)}', space=vmem, size = 0x1e000, scoped, tag = 'scratch operand']
  %s0 = inlined_call_operand.vmem [shape: f32[2,20,18,4], index: 0, kind: input, shape index: {}]
  %s1 = inlined_call_operand.vmem [shape: f32[36,8], index: 1, kind: input, shape index: {}]
  %s2 = inlined_call_operand.vmem [shape: f32[1,8], index: 2, kind: input, shape index: {}]
  %s3 = inlined_call_operand.vmem [shape: f32[72,8], index: 3, kind: input, shape index: {}]
  %s4 = inlined_call_operand.vmem [shape: f32[1,8], index: 4, kind: input, shape index: {}]
  %s5 = inlined_call_operand.vmem [shape: f32[2,16,16,8], index: 5, kind: output, shape index: {}]
  %s6 = sld [smem:[#allocation0]]
  $region61: #{tpu_custom_call.1} parent=0
    _
  %s8 = ssub.s32 1, %s6
  %s9 = scalar_select 0, %s8, %s6
  loop: start=0, step=1, limit=6
  $region2: #{tpu_custom_call.1} parent=0 // loop_pre_header
    _
  $region3: #{tpu_custom_call.1} parent=0 // loop_header
    %s11 = sphi 0, %s15
    %p12 = scmp.ge.s32.totalorder %s11, 6
    %s18 = sphi 0, %s30
    %s19 = sphi 0, %s26
    %s20 = sphi 0, %s18
    %s21 = sphi 0, %s19
    %s22 = sphi 0, %s20
    %s23 = sphi 0, %s21
    %s33 = sphi 0, %s35
    %s36 = sphi 0, %s33
    %s37 = sphi 0, %s36
    %s53 = sphi 0, %s37
    %s57 = sphi 0, %s57
    %s59 = sphi 0, %s57
    %s60 = sphi 0, %s59
    %s74 = sphi 0, %s60
    %s78 = sphi 0, %s78
    %s80 = sphi 0, %s78
    %s81 = sphi 0, %s80
    %s95 = sphi 0, %s81
    %s99 = sphi 0, %s99
    %s101 = sphi 0, %s99
    %s102 = sphi 0, %s101
    %s116 = sphi 0, %s102
    %s120 = sphi 0, %s120
    %s122 = sphi 0, %s120
    %s123 = sphi 0, %s122
    %s137 = sphi 0, %s123
    %s145 = sphi 0, %s147
    %s148 = sphi 0, %s145
    %s149 = sphi 0, %s148
    %s165 = sphi 0, %s149
  $region4: #{tpu_custom_call.1} parent=0 // loop_header_branch
    %14 = sbr.rel (%p12) target = $region8
  $region5: #{tpu_custom_call.1} parent=0 // loop_body
    %s16 = ssub.s32 %s11, 1
    %s17 = ssub.s32 %s11, 2
    %s24 = sadd.s32 1, %s19
    %p25 = scmp.ge.s32.totalorder %s24, 2
    %s26 = scalar_select %p25, 0, %s24
    %s27 = sadd.s32 1, %s18
    %s28 = scalar_select %p25, %s27, %s18
    %p29 = scmp.ge.s32.totalorder %s28, 2
    %s30 = scalar_select %p29, 0, %s28
    %s31 = ssub.s32 %s18, %s30
    %p32 = scmp.eq.s32.totalorder %s31, 0
    %s34 = sadd.s32 %s33, 1
    %s35 = scalar_select %p32, %s33, %s34
    %p38 = pneg %p32
    %p39 = scmp.eq.s32.totalorder %s11, 3
    %p40 = por %p38, %p39
    %p41 = scmp.ne.s32.totalorder %s33, %s36
    %p42 = scmp.eq.s32.totalorder %s11, 0
    %p43 = por %p41, %p42
    %p44 = scmp.ne.s32.totalorder %s33, %s36
    %p45 = scmp.eq.s32.totalorder %s16, 3
    %p46 = por %p44, %p45
    %p47 = scmp.ne.s32.totalorder %s36, %s37
    %p48 = scmp.eq.s32.totalorder %s16, 0
    %p49 = por %p47, %p48
    %p50 = scmp.ne.s32.totalorder %s36, %s37
    %p51 = scmp.eq.s32.totalorder %s17, 3
    %p52 = por %p50, %p51
    %p54 = scmp.ne.s32.totalorder %s37, %s53
    %p55 = scmp.eq.s32.totalorder %s17, 0
    %p56 = por %p54, %p55
    %s58 = sadd.s32 %s57, 1
    %p61 = scmp.eq.s32.totalorder %s11, 3
    %p62 = scmp.ne.s32.totalorder %s57, %s59
    %p63 = scmp.eq.s32.totalorder %s11, 0
    %p64 = por %p62, %p63
    %p65 = scmp.ne.s32.totalorder %s57, %s59
    %p66 = scmp.eq.s32.totalorder %s16, 3
    %p67 = por %p65, %p66
    %p68 = scmp.ne.s32.totalorder %s59, %s60
    %p69 = scmp.eq.s32.totalorder %s16, 0
    %p70 = por %p68, %p69
    %p71 = scmp.ne.s32.totalorder %s59, %s60
    %p72 = scmp.eq.s32.totalorder %s17, 3
    %p73 = por %p71, %p72
    %p75 = scmp.ne.s32.totalorder %s60, %s74
    %p76 = scmp.eq.s32.totalorder %s17, 0
    %p77 = por %p75, %p76
    %s79 = sadd.s32 %s78, 1
    %p82 = scmp.eq.s32.totalorder %s11, 3
    %p83 = scmp.ne.s32.totalorder %s78, %s80
    %p84 = scmp.eq.s32.totalorder %s11, 0
    %p85 = por %p83, %p84
    %p86 = scmp.ne.s32.totalorder %s78, %s80
    %p87 = scmp.eq.s32.totalorder %s16, 3
    %p88 = por %p86, %p87
    %p89 = scmp.ne.s32.totalorder %s80, %s81
    %p90 = scmp.eq.s32.totalorder %s16, 0
    %p91 = por %p89, %p90
    %p92 = scmp.ne.s32.totalorder %s80, %s81
    %p93 = scmp.eq.s32.totalorder %s17, 3
    %p94 = por %p92, %p93
    %p96 = scmp.ne.s32.totalorder %s81, %s95
    %p97 = scmp.eq.s32.totalorder %s17, 0
    %p98 = por %p96, %p97
    %s100 = sadd.s32 %s99, 1
    %p103 = scmp.eq.s32.totalorder %s11, 3
    %p104 = scmp.ne.s32.totalorder %s99, %s101
    %p105 = scmp.eq.s32.totalorder %s11, 0
    %p106 = por %p104, %p105
    %p107 = scmp.ne.s32.totalorder %s99, %s101
    %p108 = scmp.eq.s32.totalorder %s16, 3
    %p109 = por %p107, %p108
    %p110 = scmp.ne.s32.totalorder %s101, %s102
    %p111 = scmp.eq.s32.totalorder %s16, 0
    %p112 = por %p110, %p111
    %p113 = scmp.ne.s32.totalorder %s101, %s102
    %p114 = scmp.eq.s32.totalorder %s17, 3
    %p115 = por %p113, %p114
    %p117 = scmp.ne.s32.totalorder %s102, %s116
    %p118 = scmp.eq.s32.totalorder %s17, 0
    %p119 = por %p117, %p118
    %s121 = sadd.s32 %s120, 1
    %p124 = scmp.eq.s32.totalorder %s11, 3
    %p125 = scmp.ne.s32.totalorder %s120, %s122
    %p126 = scmp.eq.s32.totalorder %s11, 0
    %p127 = por %p125, %p126
    %p128 = scmp.ne.s32.totalorder %s120, %s122
    %p129 = scmp.eq.s32.totalorder %s16, 3
    %p130 = por %p128, %p129
    %p131 = scmp.ne.s32.totalorder %s122, %s123
    %p132 = scmp.eq.s32.totalorder %s16, 0
    %p133 = por %p131, %p132
    %p134 = scmp.ne.s32.totalorder %s122, %s123
    %p135 = scmp.eq.s32.totalorder %s17, 3
    %p136 = por %p134, %p135
    %p138 = scmp.ne.s32.totalorder %s123, %s137
    %p139 = scmp.eq.s32.totalorder %s17, 0
    %p140 = por %p138, %p139
    %s141 = ssub.s32 %s18, %s30
    %s142 = ssub.s32 %s19, %s26
    %s143 = sor.u32 %s141, %s142
    %p144 = scmp.eq.s32.totalorder %s143, 0
    %s146 = sadd.s32 %s145, 1
    %s147 = scalar_select %p144, %s145, %s146
    %p150 = pneg %p144
    %p151 = scmp.eq.s32.totalorder %s11, 3
    %p152 = por %p150, %p151
    %p153 = scmp.ne.s32.totalorder %s145, %s148
    %p154 = scmp.eq.s32.totalorder %s11, 0
    %p155 = por %p153, %p154
    %p156 = scmp.ne.s32.totalorder %s145, %s148
    %p157 = scmp.eq.s32.totalorder %s16, 3
    %p158 = por %p156, %p157
    %p159 = scmp.ne.s32.totalorder %s148, %s149
    %p160 = scmp.eq.s32.totalorder %s16, 0
    %p161 = por %p159, %p160
    %p162 = scmp.ne.s32.totalorder %s148, %s149
    %p163 = scmp.eq.s32.totalorder %s17, 3
    %p164 = por %p162, %p163
    %p166 = scmp.ne.s32.totalorder %s149, %s165
    %p167 = scmp.eq.s32.totalorder %s17, 0
    %p168 = por %p166, %p167
    %p169 = scmp.le.s32.totalorder 1, %s11
    %p170 = scmp.lt.s32.totalorder %s11, 5
    %p171 = pnand %p169, %p170
    %p172 = pneg %p171
    // Predicated region
    $region9: #{tpu_custom_call.1} parent=5 // pred_check
      _
    $region10: #{tpu_custom_call.1} parent=5 // pred_check_branch
      %174 = sbr.rel (%p171) target = $region12
    $region11: #{tpu_custom_call.1} parent=5 // pred_region
      %s175 = ssub.s32 %s11, 1
      // Predicated region
      $region13: #{tpu_custom_call.1} parent=11 // pred_check
        %p176 = pneg %p70
      $region14: #{tpu_custom_call.1} parent=11 // pred_check_branch
        %178 = sbr.rel (%p176) target = $region16
      $region15: #{tpu_custom_call.1} parent=11 // pred_region
        _
      $region16: #{tpu_custom_call.1} parent=11 // pred_fallthru
        _
      // Predicated region
      $region17: #{tpu_custom_call.1} parent=11 // pred_check
        %p179 = pneg %p91
      $region18: #{tpu_custom_call.1} parent=11 // pred_check_branch
        %181 = sbr.rel (%p179) target = $region20
      $region19: #{tpu_custom_call.1} parent=11 // pred_region
        _
      $region20: #{tpu_custom_call.1} parent=11 // pred_fallthru
        _
      // Predicated region
      $region21: #{tpu_custom_call.1} parent=11 // pred_check
        %p182 = pneg %p112
      $region22: #{tpu_custom_call.1} parent=11 // pred_check_branch
        %184 = sbr.rel (%p182) target = $region24
      $region23: #{tpu_custom_call.1} parent=11 // pred_region
        _
      $region24: #{tpu_custom_call.1} parent=11 // pred_fallthru
        _
      // Predicated region
      $region25: #{tpu_custom_call.1} parent=11 // pred_check
        %p185 = pneg %p133
      $region26: #{tpu_custom_call.1} parent=11 // pred_check_branch
        %187 = sbr.rel (%p185) target = $region28
      $region27: #{tpu_custom_call.1} parent=11 // pred_region
        _
      $region28: #{tpu_custom_call.1} parent=11 // pred_fallthru
        _
    $region12: #{tpu_custom_call.1} parent=5 // pred_fallthru
      _
    %p188 = scmp.lt.s32.totalorder %s11, 4
    // Predicated region
    $region29: #{tpu_custom_call.1} parent=5 // pred_check
      %p189 = pneg %p188
    $region30: #{tpu_custom_call.1} parent=5 // pred_check_branch
      %191 = sbr.rel (%p189) target = $region32
    $region31: #{tpu_custom_call.1} parent=5 // pred_region
      // Predicated region
      $region33: #{tpu_custom_call.1} parent=31 // pred_check
        %p192 = pneg %p43
      $region34: #{tpu_custom_call.1} parent=31 // pred_check_branch
        %194 = sbr.rel (%p192) target = $region36
      $region35: #{tpu_custom_call.1} parent=31 // pred_region
        %p195 = scmp.lt.s32.totalorder %s18, 1
        %s196 = scalar_select %p195, %s18, 1
        %s197 = smul.addr %s196, 60
        %s198 = smul.addr %s197, 8
        %s199 = scalar_lea.vmem %s0, %s198
      $region36: #{tpu_custom_call.1} parent=31 // pred_fallthru
        _
    $region32: #{tpu_custom_call.1} parent=5 // pred_fallthru
      _
    %p200 = scmp.le.s32.totalorder 1, %s11
    %p201 = scmp.lt.s32.totalorder %s11, 5
    %p202 = pnand %p200, %p201
    %p203 = pneg %p202
    // Predicated region
    $region37: #{tpu_custom_call.1} parent=5 // pred_check
      _
    $region38: #{tpu_custom_call.1} parent=5 // pred_check_branch
      %205 = sbr.rel (%p202) target = $region40
    $region39: #{tpu_custom_call.1} parent=5 // pred_region
      %s206 = ssub.s32 %s11, 1
      %p207 = scmp.lt.s32.totalorder %s20, 1
      %s208 = scalar_select %p207, %s20, 1
      %s209 = smul.addr %s208, 60
      %s210 = smul.addr %s209, 8
      %s211 = scalar_lea.vmem %s0, %s210
      %p212 = pneg %p49
      %p213 = pneg %p46
      %p214 = pneg %p70
      %p215 = pneg %p67
      %p216 = pneg %p91
      %p217 = pneg %p88
      %p218 = pneg %p112
      %p219 = pneg %p109
      %p220 = pneg %p133
      %p221 = pneg %p130
      %p222 = pneg %p161
      %p223 = pneg %p158
      %s224 = smul.u32 8, %s21
      %p225 = scmp.lt.s32.totalorder %s20, 1
      %s226 = scalar_select %p225, %s20, 1
      %p227 = scmp.lt.s32.totalorder %s224, 15
      %s228 = scalar_select %p227, %s224, 15
      %s229 = smul.addr %s228, 2
      %s230 = smul.addr %s226, 32
      %s231 = sadd.s32 %s229, %s230
      %s232 = smul.addr %s231, 8
      %s233 = scalar_lea.vmem %s5, %s232
      %p234 = scmp.lt.s32.totalorder %s20, 1
      %s235 = scalar_select %p234, %s20, 1
      %s236 = smul.addr %s235, 60
      %s237 = smul.addr %s236, 8
      %s238 = scalar_lea.vmem %s0, %s237
      %s239 = smul.u32 8, %s21
      %p240 = scmp.lt.s32.totalorder %s20, 1
      %s241 = scalar_select %p240, %s20, 1
      %p242 = scmp.lt.s32.totalorder %s239, 15
      %s243 = scalar_select %p242, %s239, 15
      %s244 = smul.addr %s243, 2
      %s245 = smul.addr %s241, 32
      %s246 = sadd.s32 %s244, %s245
      %s247 = smul.addr %s246, 8
      %s248 = scalar_lea.vmem %s5, %s247
      %s249 = smul.u32 8, %s21
      %s250 = smul.u32 %s21, 8
      %s251 = smul.u32 %s250, 24
      %s252 = scalar_lea.vmem %s238, %s251
      %v253 = vld [vmem:[%s252] sm:$0xff]
      %v254 = vld [vmem:[%s252 + $0x8] sm:$0xff]
      %v255 = vld [vmem:[%s252 + $0x18] sm:$0xff]
      %v256 = vld [vmem:[%s252 + $0x20] sm:$0xff]
      %v257 = vld [vmem:[%s252 + $0x30] sm:$0xff]
      %v258 = vld [vmem:[%s252 + $0x38] sm:$0xff]
      %v259 = vld [vmem:[%s252 + $0x48] sm:$0xff]
      %v260 = vld [vmem:[%s252 + $0x50] sm:$0xff]
      %v261 = vld [vmem:[%s252 + $0x60] sm:$0xff]
      %v262 = vld [vmem:[%s252 + $0x68] sm:$0xff]
      %v263 = vld [vmem:[%s252 + $0x78] sm:$0xff]
      %v264 = vld [vmem:[%s252 + $0x80] sm:$0xff]
      %v265 = vld [vmem:[%s252 + $0x90] sm:$0xff]
      %v266 = vld [vmem:[%s252 + $0x98] sm:$0xff]
      %v267 = vld [vmem:[%s252 + $0xa8] sm:$0xff]
      %v268 = vld [vmem:[%s252 + $0xb0] sm:$0xff]
      %v269 = vld [vmem:[%s252 + $0xc0] sm:$0xff]
      %v270 = vld [vmem:[%s252 + $0xc8] sm:$0xff]
      %v271 = vld [vmem:[%s252 + $0xd8] sm:$0xff]
      %v272 = vld [vmem:[%s252 + $0xe0] sm:$0xff]
      %v273 = vld [vmem:[%s252 + $0x1] sm:$0xff]
      %v274 = vld [vmem:[%s252 + $0x9] sm:$0xff]
      %v275 = vld [vmem:[%s252 + $0x19] sm:$0xff]
      %v276 = vld [vmem:[%s252 + $0x21] sm:$0xff]
      %v277 = vld [vmem:[%s252 + $0x31] sm:$0xff]
      %v278 = vld [vmem:[%s252 + $0x39] sm:$0xff]
      %v279 = vld [vmem:[%s252 + $0x49] sm:$0xff]
      %v280 = vld [vmem:[%s252 + $0x51] sm:$0xff]
      %v281 = vld [vmem:[%s252 + $0x61] sm:$0xff]
      %v282 = vld [vmem:[%s252 + $0x69] sm:$0xff]
      %v283 = vld [vmem:[%s252 + $0x79] sm:$0xff]
      %v284 = vld [vmem:[%s252 + $0x81] sm:$0xff]
      %v285 = vld [vmem:[%s252 + $0x91] sm:$0xff]
      %v286 = vld [vmem:[%s252 + $0x99] sm:$0xff]
      %v287 = vld [vmem:[%s252 + $0xa9] sm:$0xff]
      %v288 = vld [vmem:[%s252 + $0xb1] sm:$0xff]
      %v289 = vld [vmem:[%s252 + $0xc1] sm:$0xff]
      %v290 = vld [vmem:[%s252 + $0xc9] sm:$0xff]
      %v291 = vld [vmem:[%s252 + $0xd9] sm:$0xff]
      %v292 = vld [vmem:[%s252 + $0xe1] sm:$0xff]
      %v293 = vld [vmem:[%s252 + $0x2] sm:$0xff]
      %v294 = vld [vmem:[%s252 + $0xa] sm:$0xff]
      %v295 = vld [vmem:[%s252 + $0x1a] sm:$0xff]
      %v296 = vld [vmem:[%s252 + $0x22] sm:$0xff]
      %v297 = vld [vmem:[%s252 + $0x32] sm:$0xff]
      %v298 = vld [vmem:[%s252 + $0x3a] sm:$0xff]
      %v299 = vld [vmem:[%s252 + $0x4a] sm:$0xff]
      %v300 = vld [vmem:[%s252 + $0x52] sm:$0xff]
      %v301 = vld [vmem:[%s252 + $0x62] sm:$0xff]
      %v302 = vld [vmem:[%s252 + $0x6a] sm:$0xff]
      %v303 = vld [vmem:[%s252 + $0x7a] sm:$0xff]
      %v304 = vld [vmem:[%s252 + $0x82] sm:$0xff]
      %v305 = vld [vmem:[%s252 + $0x92] sm:$0xff]
      %v306 = vld [vmem:[%s252 + $0x9a] sm:$0xff]
      %v307 = vld [vmem:[%s252 + $0xaa] sm:$0xff]
      %v308 = vld [vmem:[%s252 + $0xb2] sm:$0xff]
      %v309 = vld [vmem:[%s252 + $0xc2] sm:$0xff]
      %v310 = vld [vmem:[%s252 + $0xca] sm:$0xff]
      %v311 = vld [vmem:[%s252 + $0xda] sm:$0xff]
      %v312 = vld [vmem:[%s252 + $0xe2] sm:$0xff]
      %s313 = sadd.s32 %s250, 1
      %s314 = smul.u32 %s313, 24
      %s315 = scalar_lea.vmem %s238, %s314
      %v316 = vld [vmem:[%s315] sm:$0xff]
      %v317 = vld [vmem:[%s315 + $0x8] sm:$0xff]
      %v318 = vld [vmem:[%s315 + $0x18] sm:$0xff]
      %v319 = vld [vmem:[%s315 + $0x20] sm:$0xff]
      %v320 = vld [vmem:[%s315 + $0x30] sm:$0xff]
      %v321 = vld [vmem:[%s315 + $0x38] sm:$0xff]
      %v322 = vld [vmem:[%s315 + $0x48] sm:$0xff]
      %v323 = vld [vmem:[%s315 + $0x50] sm:$0xff]
      %v324 = vld [vmem:[%s315 + $0x60] sm:$0xff]
      %v325 = vld [vmem:[%s315 + $0x68] sm:$0xff]
      %v326 = vld [vmem:[%s315 + $0x78] sm:$0xff]
      %v327 = vld [vmem:[%s315 + $0x80] sm:$0xff]
      %v328 = vld [vmem:[%s315 + $0x90] sm:$0xff]
      %v329 = vld [vmem:[%s315 + $0x98] sm:$0xff]
      %v330 = vld [vmem:[%s315 + $0xa8] sm:$0xff]
      %v331 = vld [vmem:[%s315 + $0xb0] sm:$0xff]
      %v332 = vld [vmem:[%s315 + $0xc0] sm:$0xff]
      %v333 = vld [vmem:[%s315 + $0xc8] sm:$0xff]
      %v334 = vld [vmem:[%s315 + $0xd8] sm:$0xff]
      %v335 = vld [vmem:[%s315 + $0xe0] sm:$0xff]
      %v336 = vld [vmem:[%s315 + $0x1] sm:$0xff]
      %v337 = vld [vmem:[%s315 + $0x9] sm:$0xff]
      %v338 = vld [vmem:[%s315 + $0x19] sm:$0xff]
      %v339 = vld [vmem:[%s315 + $0x21] sm:$0xff]
      %v340 = vld [vmem:[%s315 + $0x31] sm:$0xff]
      %v341 = vld [vmem:[%s315 + $0x39] sm:$0xff]
      %v342 = vld [vmem:[%s315 + $0x49] sm:$0xff]
      %v343 = vld [vmem:[%s315 + $0x51] sm:$0xff]
      %v344 = vld [vmem:[%s315 + $0x61] sm:$0xff]
      %v345 = vld [vmem:[%s315 + $0x69] sm:$0xff]
      %v346 = vld [vmem:[%s315 + $0x79] sm:$0xff]
      %v347 = vld [vmem:[%s315 + $0x81] sm:$0xff]
      %v348 = vld [vmem:[%s315 + $0x91] sm:$0xff]
      %v349 = vld [vmem:[%s315 + $0x99] sm:$0xff]
      %v350 = vld [vmem:[%s315 + $0xa9] sm:$0xff]
      %v351 = vld [vmem:[%s315 + $0xb1] sm:$0xff]
      %v352 = vld [vmem:[%s315 + $0xc1] sm:$0xff]
      %v353 = vld [vmem:[%s315 + $0xc9] sm:$0xff]
      %v354 = vld [vmem:[%s315 + $0xd9] sm:$0xff]
      %v355 = vld [vmem:[%s315 + $0xe1] sm:$0xff]
      %v356 = vld [vmem:[%s315 + $0x2] sm:$0xff]
      %v357 = vld [vmem:[%s315 + $0xa] sm:$0xff]
      %v358 = vld [vmem:[%s315 + $0x1a] sm:$0xff]
      %v359 = vld [vmem:[%s315 + $0x22] sm:$0xff]
      %v360 = vld [vmem:[%s315 + $0x32] sm:$0xff]
      %v361 = vld [vmem:[%s315 + $0x3a] sm:$0xff]
      %v362 = vld [vmem:[%s315 + $0x4a] sm:$0xff]
      %v363 = vld [vmem:[%s315 + $0x52] sm:$0xff]
      %v364 = vld [vmem:[%s315 + $0x62] sm:$0xff]
      %v365 = vld [vmem:[%s315 + $0x6a] sm:$0xff]
      %v366 = vld [vmem:[%s315 + $0x7a] sm:$0xff]
      %v367 = vld [vmem:[%s315 + $0x82] sm:$0xff]
      %v368 = vld [vmem:[%s315 + $0x92] sm:$0xff]
      %v369 = vld [vmem:[%s315 + $0x9a] sm:$0xff]
      %v370 = vld [vmem:[%s315 + $0xaa] sm:$0xff]
      %v371 = vld [vmem:[%s315 + $0xb2] sm:$0xff]
      %v372 = vld [vmem:[%s315 + $0xc2] sm:$0xff]
      %v373 = vld [vmem:[%s315 + $0xca] sm:$0xff]
      %v374 = vld [vmem:[%s315 + $0xda] sm:$0xff]
      %v375 = vld [vmem:[%s315 + $0xe2] sm:$0xff]
      %s376 = sadd.s32 %s250, 2
      %s377 = smul.u32 %s376, 24
      %s378 = scalar_lea.vmem %s238, %s377
      %v379 = vld [vmem:[%s378] sm:$0xff]
      %v380 = vld [vmem:[%s378 + $0x8] sm:$0xff]
      %v381 = vld [vmem:[%s378 + $0x18] sm:$0xff]
      %v382 = vld [vmem:[%s378 + $0x20] sm:$0xff]
      %v383 = vld [vmem:[%s378 + $0x30] sm:$0xff]
      %v384 = vld [vmem:[%s378 + $0x38] sm:$0xff]
      %v385 = vld [vmem:[%s378 + $0x48] sm:$0xff]
      %v386 = vld [vmem:[%s378 + $0x50] sm:$0xff]
      %v387 = vld [vmem:[%s378 + $0x60] sm:$0xff]
      %v388 = vld [vmem:[%s378 + $0x68] sm:$0xff]
      %v389 = vld [vmem:[%s378 + $0x78] sm:$0xff]
      %v390 = vld [vmem:[%s378 + $0x80] sm:$0xff]
      %v391 = vld [vmem:[%s378 + $0x90] sm:$0xff]
      %v392 = vld [vmem:[%s378 + $0x98] sm:$0xff]
      %v393 = vld [vmem:[%s378 + $0xa8] sm:$0xff]
      %v394 = vld [vmem:[%s378 + $0xb0] sm:$0xff]
      %v395 = vld [vmem:[%s378 + $0xc0] sm:$0xff]
      %v396 = vld [vmem:[%s378 + $0xc8] sm:$0xff]
      %v397 = vld [vmem:[%s378 + $0xd8] sm:$0xff]
      %v398 = vld [vmem:[%s378 + $0xe0] sm:$0xff]
      %v399 = vld [vmem:[%s378 + $0x1] sm:$0xff]
      %v400 = vld [vmem:[%s378 + $0x9] sm:$0xff]
      %v401 = vld [vmem:[%s378 + $0x19] sm:$0xff]
      %v402 = vld [vmem:[%s378 + $0x21] sm:$0xff]
      %v403 = vld [vmem:[%s378 + $0x31] sm:$0xff]
      %v404 = vld [vmem:[%s378 + $0x39] sm:$0xff]
      %v405 = vld [vmem:[%s378 + $0x49] sm:$0xff]
      %v406 = vld [vmem:[%s378 + $0x51] sm:$0xff]
      %v407 = vld [vmem:[%s378 + $0x61] sm:$0xff]
      %v408 = vld [vmem:[%s378 + $0x69] sm:$0xff]
      %v409 = vld [vmem:[%s378 + $0x79] sm:$0xff]
      %v410 = vld [vmem:[%s378 + $0x81] sm:$0xff]
      %v411 = vld [vmem:[%s378 + $0x91] sm:$0xff]
      %v412 = vld [vmem:[%s378 + $0x99] sm:$0xff]
      %v413 = vld [vmem:[%s378 + $0xa9] sm:$0xff]
      %v414 = vld [vmem:[%s378 + $0xb1] sm:$0xff]
      %v415 = vld [vmem:[%s378 + $0xc1] sm:$0xff]
      %v416 = vld [vmem:[%s378 + $0xc9] sm:$0xff]
      %v417 = vld [vmem:[%s378 + $0xd9] sm:$0xff]
      %v418 = vld [vmem:[%s378 + $0xe1] sm:$0xff]
      %v419 = vld [vmem:[%s378 + $0x2] sm:$0xff]
      %v420 = vld [vmem:[%s378 + $0xa] sm:$0xff]
      %v421 = vld [vmem:[%s378 + $0x1a] sm:$0xff]
      %v422 = vld [vmem:[%s378 + $0x22] sm:$0xff]
      %v423 = vld [vmem:[%s378 + $0x32] sm:$0xff]
      %v424 = vld [vmem:[%s378 + $0x3a] sm:$0xff]
      %v425 = vld [vmem:[%s378 + $0x4a] sm:$0xff]
      %v426 = vld [vmem:[%s378 + $0x52] sm:$0xff]
      %v427 = vld [vmem:[%s378 + $0x62] sm:$0xff]
      %v428 = vld [vmem:[%s378 + $0x6a] sm:$0xff]
      %v429 = vld [vmem:[%s378 + $0x7a] sm:$0xff]
      %v430 = vld [vmem:[%s378 + $0x82] sm:$0xff]
      %v431 = vld [vmem:[%s378 + $0x92] sm:$0xff]
      %v432 = vld [vmem:[%s378 + $0x9a] sm:$0xff]
      %v433 = vld [vmem:[%s378 + $0xaa] sm:$0xff]
      %v434 = vld [vmem:[%s378 + $0xb2] sm:$0xff]
      %v435 = vld [vmem:[%s378 + $0xc2] sm:$0xff]
      %v436 = vld [vmem:[%s378 + $0xca] sm:$0xff]
      %v437 = vld [vmem:[%s378 + $0xda] sm:$0xff]
      %v438 = vld [vmem:[%s378 + $0xe2] sm:$0xff]
      %459 = vrot.lane.b32.xlu0 %v273, 4
      %v460 = vpop.permute.xlu0 %459
      %461 = vrot.lane.b32.xlu0 %v274, 4
      %v462 = vpop.permute.xlu0 %461
      %463 = vrot.lane.b32.xlu0 %v275, 4
      %v464 = vpop.permute.xlu0 %463
      %465 = vrot.lane.b32.xlu0 %v276, 4
      %v466 = vpop.permute.xlu0 %465
      %467 = vrot.lane.b32.xlu0 %v277, 4
      %v468 = vpop.permute.xlu0 %467
      %469 = vrot.lane.b32.xlu0 %v278, 4
      %v470 = vpop.permute.xlu0 %469
      %471 = vrot.lane.b32.xlu0 %v279, 4
      %v472 = vpop.permute.xlu0 %471
      %473 = vrot.lane.b32.xlu0 %v280, 4
      %v474 = vpop.permute.xlu0 %473
      %475 = vrot.lane.b32.xlu0 %v281, 4
      %v476 = vpop.permute.xlu0 %475
      %477 = vrot.lane.b32.xlu0 %v282, 4
      %v478 = vpop.permute.xlu0 %477
      %479 = vrot.lane.b32.xlu0 %v283, 4
      %v480 = vpop.permute.xlu0 %479
      %481 = vrot.lane.b32.xlu0 %v284, 4
      %v482 = vpop.permute.xlu0 %481
      %483 = vrot.lane.b32.xlu0 %v285, 4
      %v484 = vpop.permute.xlu0 %483
      %485 = vrot.lane.b32.xlu0 %v286, 4
      %v486 = vpop.permute.xlu0 %485
      %487 = vrot.lane.b32.xlu0 %v287, 4
      %v488 = vpop.permute.xlu0 %487
      %489 = vrot.lane.b32.xlu0 %v288, 4
      %v490 = vpop.permute.xlu0 %489
      %491 = vrot.lane.b32.xlu0 %v289, 4
      %v492 = vpop.permute.xlu0 %491
      %493 = vrot.lane.b32.xlu0 %v290, 4
      %v494 = vpop.permute.xlu0 %493
      %495 = vrot.lane.b32.xlu0 %v291, 4
      %v496 = vpop.permute.xlu0 %495
      %497 = vrot.lane.b32.xlu0 %v292, 4
      %v498 = vpop.permute.xlu0 %497
      %539 = vrot.lane.b32.xlu0 %v293, 8
      %v540 = vpop.permute.xlu0 %539
      %541 = vrot.lane.b32.xlu0 %v294, 8
      %v542 = vpop.permute.xlu0 %541
      %543 = vrot.lane.b32.xlu0 %v295, 8
      %v544 = vpop.permute.xlu0 %543
      %545 = vrot.lane.b32.xlu0 %v296, 8
      %v546 = vpop.permute.xlu0 %545
      %547 = vrot.lane.b32.xlu0 %v297, 8
      %v548 = vpop.permute.xlu0 %547
      %549 = vrot.lane.b32.xlu0 %v298, 8
      %v550 = vpop.permute.xlu0 %549
      %551 = vrot.lane.b32.xlu0 %v299, 8
      %v552 = vpop.permute.xlu0 %551
      %553 = vrot.lane.b32.xlu0 %v300, 8
      %v554 = vpop.permute.xlu0 %553
      %555 = vrot.lane.b32.xlu0 %v301, 8
      %v556 = vpop.permute.xlu0 %555
      %557 = vrot.lane.b32.xlu0 %v302, 8
      %v558 = vpop.permute.xlu0 %557
      %559 = vrot.lane.b32.xlu0 %v303, 8
      %v560 = vpop.permute.xlu0 %559
      %561 = vrot.lane.b32.xlu0 %v304, 8
      %v562 = vpop.permute.xlu0 %561
      %563 = vrot.lane.b32.xlu0 %v305, 8
      %v564 = vpop.permute.xlu0 %563
      %565 = vrot.lane.b32.xlu0 %v306, 8
      %v566 = vpop.permute.xlu0 %565
      %567 = vrot.lane.b32.xlu0 %v307, 8
      %v568 = vpop.permute.xlu0 %567
      %569 = vrot.lane.b32.xlu0 %v308, 8
      %v570 = vpop.permute.xlu0 %569
      %571 = vrot.lane.b32.xlu0 %v309, 8
      %v572 = vpop.permute.xlu0 %571
      %573 = vrot.lane.b32.xlu0 %v310, 8
      %v574 = vpop.permute.xlu0 %573
      %575 = vrot.lane.b32.xlu0 %v311, 8
      %v576 = vpop.permute.xlu0 %575
      %577 = vrot.lane.b32.xlu0 %v312, 8
      %v578 = vpop.permute.xlu0 %577
      %619 = vrot.lane.b32.xlu0 %v316, 12
      %v620 = vpop.permute.xlu0 %619
      %621 = vrot.lane.b32.xlu0 %v317, 12
      %v622 = vpop.permute.xlu0 %621
      %623 = vrot.lane.b32.xlu0 %v318, 12
      %v624 = vpop.permute.xlu0 %623
      %625 = vrot.lane.b32.xlu0 %v319, 12
      %v626 = vpop.permute.xlu0 %625
      %627 = vrot.lane.b32.xlu0 %v320, 12
      %v628 = vpop.permute.xlu0 %627
      %629 = vrot.lane.b32.xlu0 %v321, 12
      %v630 = vpop.permute.xlu0 %629
      %631 = vrot.lane.b32.xlu0 %v322, 12
      %v632 = vpop.permute.xlu0 %631
      %633 = vrot.lane.b32.xlu0 %v323, 12
      %v634 = vpop.permute.xlu0 %633
      %635 = vrot.lane.b32.xlu0 %v324, 12
      %v636 = vpop.permute.xlu0 %635
      %637 = vrot.lane.b32.xlu0 %v325, 12
      %v638 = vpop.permute.xlu0 %637
      %639 = vrot.lane.b32.xlu0 %v326, 12
      %v640 = vpop.permute.xlu0 %639
      %641 = vrot.lane.b32.xlu0 %v327, 12
      %v642 = vpop.permute.xlu0 %641
      %643 = vrot.lane.b32.xlu0 %v328, 12
      %v644 = vpop.permute.xlu0 %643
      %645 = vrot.lane.b32.xlu0 %v329, 12
      %v646 = vpop.permute.xlu0 %645
      %647 = vrot.lane.b32.xlu0 %v330, 12
      %v648 = vpop.permute.xlu0 %647
      %649 = vrot.lane.b32.xlu0 %v331, 12
      %v650 = vpop.permute.xlu0 %649
      %651 = vrot.lane.b32.xlu0 %v332, 12
      %v652 = vpop.permute.xlu0 %651
      %653 = vrot.lane.b32.xlu0 %v333, 12
      %v654 = vpop.permute.xlu0 %653
      %655 = vrot.lane.b32.xlu0 %v334, 12
      %v656 = vpop.permute.xlu0 %655
      %657 = vrot.lane.b32.xlu0 %v335, 12
      %v658 = vpop.permute.xlu0 %657
      %699 = vrot.lane.b32.xlu0 %v336, 16
      %v700 = vpop.permute.xlu0 %699
      %701 = vrot.lane.b32.xlu0 %v337, 16
      %v702 = vpop.permute.xlu0 %701
      %703 = vrot.lane.b32.xlu0 %v338, 16
      %v704 = vpop.permute.xlu0 %703
      %705 = vrot.lane.b32.xlu0 %v339, 16
      %v706 = vpop.permute.xlu0 %705
      %707 = vrot.lane.b32.xlu0 %v340, 16
      %v708 = vpop.permute.xlu0 %707
      %709 = vrot.lane.b32.xlu0 %v341, 16
      %v710 = vpop.permute.xlu0 %709
      %711 = vrot.lane.b32.xlu0 %v342, 16
      %v712 = vpop.permute.xlu0 %711
      %713 = vrot.lane.b32.xlu0 %v343, 16
      %v714 = vpop.permute.xlu0 %713
      %715 = vrot.lane.b32.xlu0 %v344, 16
      %v716 = vpop.permute.xlu0 %715
      %717 = vrot.lane.b32.xlu0 %v345, 16
      %v718 = vpop.permute.xlu0 %717
      %719 = vrot.lane.b32.xlu0 %v346, 16
      %v720 = vpop.permute.xlu0 %719
      %721 = vrot.lane.b32.xlu0 %v347, 16
      %v722 = vpop.permute.xlu0 %721
      %723 = vrot.lane.b32.xlu0 %v348, 16
      %v724 = vpop.permute.xlu0 %723
      %725 = vrot.lane.b32.xlu0 %v349, 16
      %v726 = vpop.permute.xlu0 %725
      %727 = vrot.lane.b32.xlu0 %v350, 16
      %v728 = vpop.permute.xlu0 %727
      %729 = vrot.lane.b32.xlu0 %v351, 16
      %v730 = vpop.permute.xlu0 %729
      %731 = vrot.lane.b32.xlu0 %v352, 16
      %v732 = vpop.permute.xlu0 %731
      %733 = vrot.lane.b32.xlu0 %v353, 16
      %v734 = vpop.permute.xlu0 %733
      %735 = vrot.lane.b32.xlu0 %v354, 16
      %v736 = vpop.permute.xlu0 %735
      %737 = vrot.lane.b32.xlu0 %v355, 16
      %v738 = vpop.permute.xlu0 %737
      %779 = vrot.lane.b32.xlu0 %v356, 20
      %v780 = vpop.permute.xlu0 %779
      %781 = vrot.lane.b32.xlu0 %v357, 20
      %v782 = vpop.permute.xlu0 %781
      %783 = vrot.lane.b32.xlu0 %v358, 20
      %v784 = vpop.permute.xlu0 %783
      %785 = vrot.lane.b32.xlu0 %v359, 20
      %v786 = vpop.permute.xlu0 %785
      %787 = vrot.lane.b32.xlu0 %v360, 20
      %v788 = vpop.permute.xlu0 %787
      %789 = vrot.lane.b32.xlu0 %v361, 20
      %v790 = vpop.permute.xlu0 %789
      %791 = vrot.lane.b32.xlu0 %v362, 20
      %v792 = vpop.permute.xlu0 %791
      %793 = vrot.lane.b32.xlu0 %v363, 20
      %v794 = vpop.permute.xlu0 %793
      %795 = vrot.lane.b32.xlu0 %v364, 20
      %v796 = vpop.permute.xlu0 %795
      %797 = vrot.lane.b32.xlu0 %v365, 20
      %v798 = vpop.permute.xlu0 %797
      %799 = vrot.lane.b32.xlu0 %v366, 20
      %v800 = vpop.permute.xlu0 %799
      %801 = vrot.lane.b32.xlu0 %v367, 20
      %v802 = vpop.permute.xlu0 %801
      %803 = vrot.lane.b32.xlu0 %v368, 20
      %v804 = vpop.permute.xlu0 %803
      %805 = vrot.lane.b32.xlu0 %v369, 20
      %v806 = vpop.permute.xlu0 %805
      %807 = vrot.lane.b32.xlu0 %v370, 20
      %v808 = vpop.permute.xlu0 %807
      %809 = vrot.lane.b32.xlu0 %v371, 20
      %v810 = vpop.permute.xlu0 %809
      %811 = vrot.lane.b32.xlu0 %v372, 20
      %v812 = vpop.permute.xlu0 %811
      %813 = vrot.lane.b32.xlu0 %v373, 20
      %v814 = vpop.permute.xlu0 %813
      %815 = vrot.lane.b32.xlu0 %v374, 20
      %v816 = vpop.permute.xlu0 %815
      %817 = vrot.lane.b32.xlu0 %v375, 20
      %v818 = vpop.permute.xlu0 %817
      %859 = vrot.lane.b32.xlu0 %v379, 24
      %v860 = vpop.permute.xlu0 %859
      %861 = vrot.lane.b32.xlu0 %v380, 24
      %v862 = vpop.permute.xlu0 %861
      %863 = vrot.lane.b32.xlu0 %v381, 24
      %v864 = vpop.permute.xlu0 %863
      %865 = vrot.lane.b32.xlu0 %v382, 24
      %v866 = vpop.permute.xlu0 %865
      %867 = vrot.lane.b32.xlu0 %v383, 24
      %v868 = vpop.permute.xlu0 %867
      %869 = vrot.lane.b32.xlu0 %v384, 24
      %v870 = vpop.permute.xlu0 %869
      %871 = vrot.lane.b32.xlu0 %v385, 24
      %v872 = vpop.permute.xlu0 %871
      %873 = vrot.lane.b32.xlu0 %v386, 24
      %v874 = vpop.permute.xlu0 %873
      %875 = vrot.lane.b32.xlu0 %v387, 24
      %v876 = vpop.permute.xlu0 %875
      %877 = vrot.lane.b32.xlu0 %v388, 24
      %v878 = vpop.permute.xlu0 %877
      %879 = vrot.lane.b32.xlu0 %v389, 24
      %v880 = vpop.permute.xlu0 %879
      %881 = vrot.lane.b32.xlu0 %v390, 24
      %v882 = vpop.permute.xlu0 %881
      %883 = vrot.lane.b32.xlu0 %v391, 24
      %v884 = vpop.permute.xlu0 %883
      %885 = vrot.lane.b32.xlu0 %v392, 24
      %v886 = vpop.permute.xlu0 %885
      %887 = vrot.lane.b32.xlu0 %v393, 24
      %v888 = vpop.permute.xlu0 %887
      %889 = vrot.lane.b32.xlu0 %v394, 24
      %v890 = vpop.permute.xlu0 %889
      %891 = vrot.lane.b32.xlu0 %v395, 24
      %v892 = vpop.permute.xlu0 %891
      %893 = vrot.lane.b32.xlu0 %v396, 24
      %v894 = vpop.permute.xlu0 %893
      %895 = vrot.lane.b32.xlu0 %v397, 24
      %v896 = vpop.permute.xlu0 %895
      %897 = vrot.lane.b32.xlu0 %v398, 24
      %v898 = vpop.permute.xlu0 %897
      %939 = vrot.lane.b32.xlu0 %v399, 28
      %v940 = vpop.permute.xlu0 %939
      %941 = vrot.lane.b32.xlu0 %v400, 28
      %v942 = vpop.permute.xlu0 %941
      %943 = vrot.lane.b32.xlu0 %v401, 28
      %v944 = vpop.permute.xlu0 %943
      %945 = vrot.lane.b32.xlu0 %v402, 28
      %v946 = vpop.permute.xlu0 %945
      %947 = vrot.lane.b32.xlu0 %v403, 28
      %v948 = vpop.permute.xlu0 %947
      %949 = vrot.lane.b32.xlu0 %v404, 28
      %v950 = vpop.permute.xlu0 %949
      %951 = vrot.lane.b32.xlu0 %v405, 28
      %v952 = vpop.permute.xlu0 %951
      %953 = vrot.lane.b32.xlu0 %v406, 28
      %v954 = vpop.permute.xlu0 %953
      %955 = vrot.lane.b32.xlu0 %v407, 28
      %v956 = vpop.permute.xlu0 %955
      %957 = vrot.lane.b32.xlu0 %v408, 28
      %v958 = vpop.permute.xlu0 %957
      %959 = vrot.lane.b32.xlu0 %v409, 28
      %v960 = vpop.permute.xlu0 %959
      %961 = vrot.lane.b32.xlu0 %v410, 28
      %v962 = vpop.permute.xlu0 %961
      %963 = vrot.lane.b32.xlu0 %v411, 28
      %v964 = vpop.permute.xlu0 %963
      %965 = vrot.lane.b32.xlu0 %v412, 28
      %v966 = vpop.permute.xlu0 %965
      %967 = vrot.lane.b32.xlu0 %v413, 28
      %v968 = vpop.permute.xlu0 %967
      %969 = vrot.lane.b32.xlu0 %v414, 28
      %v970 = vpop.permute.xlu0 %969
      %971 = vrot.lane.b32.xlu0 %v415, 28
      %v972 = vpop.permute.xlu0 %971
      %973 = vrot.lane.b32.xlu0 %v416, 28
      %v974 = vpop.permute.xlu0 %973
      %975 = vrot.lane.b32.xlu0 %v417, 28
      %v976 = vpop.permute.xlu0 %975
      %977 = vrot.lane.b32.xlu0 %v418, 28
      %v978 = vpop.permute.xlu0 %977
      %1019 = vrot.lane.b32.xlu0 %v419, 32
      %v1020 = vpop.permute.xlu0 %1019
      %1021 = vrot.lane.b32.xlu0 %v420, 32
      %v1022 = vpop.permute.xlu0 %1021
      %1023 = vrot.lane.b32.xlu0 %v421, 32
      %v1024 = vpop.permute.xlu0 %1023
      %1025 = vrot.lane.b32.xlu0 %v422, 32
      %v1026 = vpop.permute.xlu0 %1025
      %1027 = vrot.lane.b32.xlu0 %v423, 32
      %v1028 = vpop.permute.xlu0 %1027
      %1029 = vrot.lane.b32.xlu0 %v424, 32
      %v1030 = vpop.permute.xlu0 %1029
      %1031 = vrot.lane.b32.xlu0 %v425, 32
      %v1032 = vpop.permute.xlu0 %1031
      %1033 = vrot.lane.b32.xlu0 %v426, 32
      %v1034 = vpop.permute.xlu0 %1033
      %1035 = vrot.lane.b32.xlu0 %v427, 32
      %v1036 = vpop.permute.xlu0 %1035
      %1037 = vrot.lane.b32.xlu0 %v428, 32
      %v1038 = vpop.permute.xlu0 %1037
      %1039 = vrot.lane.b32.xlu0 %v429, 32
      %v1040 = vpop.permute.xlu0 %1039
      %1041 = vrot.lane.b32.xlu0 %v430, 32
      %v1042 = vpop.permute.xlu0 %1041
      %1043 = vrot.lane.b32.xlu0 %v431, 32
      %v1044 = vpop.permute.xlu0 %1043
      %1045 = vrot.lane.b32.xlu0 %v432, 32
      %v1046 = vpop.permute.xlu0 %1045
      %1047 = vrot.lane.b32.xlu0 %v433, 32
      %v1048 = vpop.permute.xlu0 %1047
      %1049 = vrot.lane.b32.xlu0 %v434, 32
      %v1050 = vpop.permute.xlu0 %1049
      %1051 = vrot.lane.b32.xlu0 %v435, 32
      %v1052 = vpop.permute.xlu0 %1051
      %1053 = vrot.lane.b32.xlu0 %v436, 32
      %v1054 = vpop.permute.xlu0 %1053
      %1055 = vrot.lane.b32.xlu0 %v437, 32
      %v1056 = vpop.permute.xlu0 %1055
      %1057 = vrot.lane.b32.xlu0 %v438, 32
      %v1058 = vpop.permute.xlu0 %1057
      %vm1079 = vcmask 31744
      %v1080 = vsel %vm1079, %v253, %v460
      %v1081 = vsel %vm1079, %v254, %v462
      %v1082 = vsel %vm1079, %v255, %v464
      %v1083 = vsel %vm1079, %v256, %v466
      %v1084 = vsel %vm1079, %v257, %v468
      %v1085 = vsel %vm1079, %v258, %v470
      %v1086 = vsel %vm1079, %v259, %v472
      %v1087 = vsel %vm1079, %v260, %v474
      %v1088 = vsel %vm1079, %v261, %v476
      %v1089 = vsel %vm1079, %v262, %v478
      %v1090 = vsel %vm1079, %v263, %v480
      %v1091 = vsel %vm1079, %v264, %v482
      %v1092 = vsel %vm1079, %v265, %v484
      %v1093 = vsel %vm1079, %v266, %v486
      %v1094 = vsel %vm1079, %v267, %v488
      %v1095 = vsel %vm1079, %v268, %v490
      %v1096 = vsel %vm1079, %v269, %v492
      %v1097 = vsel %vm1079, %v270, %v494
      %v1098 = vsel %vm1079, %v271, %v496
      %v1099 = vsel %vm1079, %v272, %v498
      %vm1100 = vcmask 64512
      %v1101 = vsel %vm1100, %v1080, %v540
      %v1102 = vsel %vm1100, %v1081, %v542
      %v1103 = vsel %vm1100, %v1082, %v544
      %v1104 = vsel %vm1100, %v1083, %v546
      %v1105 = vsel %vm1100, %v1084, %v548
      %v1106 = vsel %vm1100, %v1085, %v550
      %v1107 = vsel %vm1100, %v1086, %v552
      %v1108 = vsel %vm1100, %v1087, %v554
      %v1109 = vsel %vm1100, %v1088, %v556
      %v1110 = vsel %vm1100, %v1089, %v558
      %v1111 = vsel %vm1100, %v1090, %v560
      %v1112 = vsel %vm1100, %v1091, %v562
      %v1113 = vsel %vm1100, %v1092, %v564
      %v1114 = vsel %vm1100, %v1093, %v566
      %v1115 = vsel %vm1100, %v1094, %v568
      %v1116 = vsel %vm1100, %v1095, %v570
      %v1117 = vsel %vm1100, %v1096, %v572
      %v1118 = vsel %vm1100, %v1097, %v574
      %v1119 = vsel %vm1100, %v1098, %v576
      %v1120 = vsel %vm1100, %v1099, %v578
      %vm1121 = vcmask 97280
      %v1122 = vsel %vm1121, %v1101, %v620
      %v1123 = vsel %vm1121, %v1102, %v622
      %v1124 = vsel %vm1121, %v1103, %v624
      %v1125 = vsel %vm1121, %v1104, %v626
      %v1126 = vsel %vm1121, %v1105, %v628
      %v1127 = vsel %vm1121, %v1106, %v630
      %v1128 = vsel %vm1121, %v1107, %v632
      %v1129 = vsel %vm1121, %v1108, %v634
      %v1130 = vsel %vm1121, %v1109, %v636
      %v1131 = vsel %vm1121, %v1110, %v638
      %v1132 = vsel %vm1121, %v1111, %v640
      %v1133 = vsel %vm1121, %v1112, %v642
      %v1134 = vsel %vm1121, %v1113, %v644
      %v1135 = vsel %vm1121, %v1114, %v646
      %v1136 = vsel %vm1121, %v1115, %v648
      %v1137 = vsel %vm1121, %v1116, %v650
      %v1138 = vsel %vm1121, %v1117, %v652
      %v1139 = vsel %vm1121, %v1118, %v654
      %v1140 = vsel %vm1121, %v1119, %v656
      %v1141 = vsel %vm1121, %v1120, %v658
      %vm1142 = vcmask 130048
      %v1143 = vsel %vm1142, %v1122, %v700
      %v1144 = vsel %vm1142, %v1123, %v702
      %v1145 = vsel %vm1142, %v1124, %v704
      %v1146 = vsel %vm1142, %v1125, %v706
      %v1147 = vsel %vm1142, %v1126, %v708
      %v1148 = vsel %vm1142, %v1127, %v710
      %v1149 = vsel %vm1142, %v1128, %v712
      %v1150 = vsel %vm1142, %v1129, %v714
      %v1151 = vsel %vm1142, %v1130, %v716
      %v1152 = vsel %vm1142, %v1131, %v718
      %v1153 = vsel %vm1142, %v1132, %v720
      %v1154 = vsel %vm1142, %v1133, %v722
      %v1155 = vsel %vm1142, %v1134, %v724
      %v1156 = vsel %vm1142, %v1135, %v726
      %v1157 = vsel %vm1142, %v1136, %v728
      %v1158 = vsel %vm1142, %v1137, %v730
      %v1159 = vsel %vm1142, %v1138, %v732
      %v1160 = vsel %vm1142, %v1139, %v734
      %v1161 = vsel %vm1142, %v1140, %v736
      %v1162 = vsel %vm1142, %v1141, %v738
      %vm1163 = vcmask 162816
      %v1164 = vsel %vm1163, %v1143, %v780
      %v1165 = vsel %vm1163, %v1144, %v782
      %v1166 = vsel %vm1163, %v1145, %v784
      %v1167 = vsel %vm1163, %v1146, %v786
      %v1168 = vsel %vm1163, %v1147, %v788
      %v1169 = vsel %vm1163, %v1148, %v790
      %v1170 = vsel %vm1163, %v1149, %v792
      %v1171 = vsel %vm1163, %v1150, %v794
      %v1172 = vsel %vm1163, %v1151, %v796
      %v1173 = vsel %vm1163, %v1152, %v798
      %v1174 = vsel %vm1163, %v1153, %v800
      %v1175 = vsel %vm1163, %v1154, %v802
      %v1176 = vsel %vm1163, %v1155, %v804
      %v1177 = vsel %vm1163, %v1156, %v806
      %v1178 = vsel %vm1163, %v1157, %v808
      %v1179 = vsel %vm1163, %v1158, %v810
      %v1180 = vsel %vm1163, %v1159, %v812
      %v1181 = vsel %vm1163, %v1160, %v814
      %v1182 = vsel %vm1163, %v1161, %v816
      %v1183 = vsel %vm1163, %v1162, %v818
      %vm1184 = vcmask 195584
      %v1185 = vsel %vm1184, %v1164, %v860
      %v1186 = vsel %vm1184, %v1165, %v862
      %v1187 = vsel %vm1184, %v1166, %v864
      %v1188 = vsel %vm1184, %v1167, %v866
      %v1189 = vsel %vm1184, %v1168, %v868
      %v1190 = vsel %vm1184, %v1169, %v870
      %v1191 = vsel %vm1184, %v1170, %v872
      %v1192 = vsel %vm1184, %v1171, %v874
      %v1193 = vsel %vm1184, %v1172, %v876
      %v1194 = vsel %vm1184, %v1173, %v878
      %v1195 = vsel %vm1184, %v1174, %v880
      %v1196 = vsel %vm1184, %v1175, %v882
      %v1197 = vsel %vm1184, %v1176, %v884
      %v1198 = vsel %vm1184, %v1177, %v886
      %v1199 = vsel %vm1184, %v1178, %v888
      %v1200 = vsel %vm1184, %v1179, %v890
      %v1201 = vsel %vm1184, %v1180, %v892
      %v1202 = vsel %vm1184, %v1181, %v894
      %v1203 = vsel %vm1184, %v1182, %v896
      %v1204 = vsel %vm1184, %v1183, %v898
      %vm1205 = vcmask 228352
      %v1206 = vsel %vm1205, %v1185, %v940
      %v1207 = vsel %vm1205, %v1186, %v942
      %v1208 = vsel %vm1205, %v1187, %v944
      %v1209 = vsel %vm1205, %v1188, %v946
      %v1210 = vsel %vm1205, %v1189, %v948
      %v1211 = vsel %vm1205, %v1190, %v950
      %v1212 = vsel %vm1205, %v1191, %v952
      %v1213 = vsel %vm1205, %v1192, %v954
      %v1214 = vsel %vm1205, %v1193, %v956
      %v1215 = vsel %vm1205, %v1194, %v958
      %v1216 = vsel %vm1205, %v1195, %v960
      %v1217 = vsel %vm1205, %v1196, %v962
      %v1218 = vsel %vm1205, %v1197, %v964
      %v1219 = vsel %vm1205, %v1198, %v966
      %v1220 = vsel %vm1205, %v1199, %v968
      %v1221 = vsel %vm1205, %v1200, %v970
      %v1222 = vsel %vm1205, %v1201, %v972
      %v1223 = vsel %vm1205, %v1202, %v974
      %v1224 = vsel %vm1205, %v1203, %v976
      %v1225 = vsel %vm1205, %v1204, %v978
      %vm1226 = vcmask 261120
      %v1227 = vsel %vm1226, %v1206, %v1020
      %v1228 = vsel %vm1226, %v1207, %v1022
      %v1229 = vsel %vm1226, %v1208, %v1024
      %v1230 = vsel %vm1226, %v1209, %v1026
      %v1231 = vsel %vm1226, %v1210, %v1028
      %v1232 = vsel %vm1226, %v1211, %v1030
      %v1233 = vsel %vm1226, %v1212, %v1032
      %v1234 = vsel %vm1226, %v1213, %v1034
      %v1235 = vsel %vm1226, %v1214, %v1036
      %v1236 = vsel %vm1226, %v1215, %v1038
      %v1237 = vsel %vm1226, %v1216, %v1040
      %v1238 = vsel %vm1226, %v1217, %v1042
      %v1239 = vsel %vm1226, %v1218, %v1044
      %v1240 = vsel %vm1226, %v1219, %v1046
      %v1241 = vsel %vm1226, %v1220, %v1048
      %v1242 = vsel %vm1226, %v1221, %v1050
      %v1243 = vsel %vm1226, %v1222, %v1052
      %v1244 = vsel %vm1226, %v1223, %v1054
      %v1245 = vsel %vm1226, %v1224, %v1056
      %v1246 = vsel %vm1226, %v1225, %v1058
      %v1247 = vld [vmem:[%s1] sm:$0xff]
      %v1248 = vld [vmem:[%s1 + $0x8] sm:$0xff]
      %v1249 = vld [vmem:[%s1 + $0x10] sm:$0xff]
      %v1250 = vld [vmem:[%s1 + $0x18] sm:$0xff]
      %v1251 = vld [vmem:[%s1 + $0x20] sm:$0xf]
      %v1252 = vld [vmem:[%s2] sm:$0x1]
      %v1254 = vperm.slane %v1252, 0
      %vm1256 = vcmask 293888
      %v1258 = vsel %vm1256, %v1227, 0
      %v1261 = vsel %vm1256, %v1228, 0
      %v1264 = vsel %vm1256, %v1229, 0
      %v1267 = vsel %vm1256, %v1230, 0
      %v1270 = vsel %vm1256, %v1231, 0
      %v1273 = vsel %vm1256, %v1232, 0
      %v1276 = vsel %vm1256, %v1233, 0
      %v1279 = vsel %vm1256, %v1234, 0
      %v1282 = vsel %vm1256, %v1235, 0
      %v1285 = vsel %vm1256, %v1236, 0
      %v1288 = vsel %vm1256, %v1237, 0
      %v1291 = vsel %vm1256, %v1238, 0
      %v1294 = vsel %vm1256, %v1239, 0
      %v1297 = vsel %vm1256, %v1240, 0
      %v1300 = vsel %vm1256, %v1241, 0
      %v1303 = vsel %vm1256, %v1242, 0
      %v1306 = vsel %vm1256, %v1243, 0
      %v1309 = vsel %vm1256, %v1244, 0
      %v1312 = vsel %vm1256, %v1245, 0
      %v1315 = vsel %vm1256, %v1246, 0
      %vm1317 = vcmask 1043456
      %v1319 = vsel %vm1317, %v1251, 0
      %1321 = vmatpush.msra.mxu0 0.0
      %1322 = vmatpush.msra.mxu0 0.0
      %1323 = vmatpush.msra.mxu0 0.0
      %1324 = vmatpush.msra.mxu0 0.0
      %1325 = vmatpush.msra.mxu0 0.0
      %1326 = vmatpush.msra.mxu0 0.0
      %1327 = vmatpush.msra.mxu0 0.0
      %1328 = vmatpush.msra.mxu0 0.0
      %1329 = vmatpush.msra.mxu0 0.0
      %1330 = vmatpush.msra.mxu0 0.0
      %1331 = vmatpush.msra.mxu0 0.0
      %1332 = vmatpush.msra.mxu0 %v1319
      %1333 = vmatpush.msra.mxu0 %v1250
      %1334 = vmatpush.msra.mxu0 %v1249
      %1335 = vmatpush.msra.mxu0 %v1248
      %1336 = vmatpush.msra.mxu0 %v1247
      %1337 = vmatmul.f32.gmra.mxu0 %v1258
      %v1338 = vpop.f32.mrf.mxu0
      %v1339 = vadd.f32 %v1254, %v1338
      %1340 = vmatmul.f32.gmra.mxu0 %v1261
      %v1341 = vpop.f32.mrf.mxu0
      %v1342 = vadd.f32 %v1254, %v1341
      %1343 = vmatmul.f32.gmra.mxu0 %v1264
      %v1344 = vpop.f32.mrf.mxu0
      %v1345 = vadd.f32 %v1254, %v1344
      %1346 = vmatmul.f32.gmra.mxu0 %v1267
      %v1347 = vpop.f32.mrf.mxu0
      %v1348 = vadd.f32 %v1254, %v1347
      %1349 = vmatmul.f32.gmra.mxu0 %v1270
      %v1350 = vpop.f32.mrf.mxu0
      %v1351 = vadd.f32 %v1254, %v1350
      %1352 = vmatmul.f32.gmra.mxu0 %v1273
      %v1353 = vpop.f32.mrf.mxu0
      %v1354 = vadd.f32 %v1254, %v1353
      %1355 = vmatmul.f32.gmra.mxu0 %v1276
      %v1356 = vpop.f32.mrf.mxu0
      %v1357 = vadd.f32 %v1254, %v1356
      %1358 = vmatmul.f32.gmra.mxu0 %v1279
      %v1359 = vpop.f32.mrf.mxu0
      %v1360 = vadd.f32 %v1254, %v1359
      %1361 = vmatmul.f32.gmra.mxu0 %v1282
      %v1362 = vpop.f32.mrf.mxu0
      %v1363 = vadd.f32 %v1254, %v1362
      %1364 = vmatmul.f32.gmra.mxu0 %v1285
      %v1365 = vpop.f32.mrf.mxu0
      %v1366 = vadd.f32 %v1254, %v1365
      %1367 = vmatmul.f32.gmra.mxu0 %v1288
      %v1368 = vpop.f32.mrf.mxu0
      %v1369 = vadd.f32 %v1254, %v1368
      %1370 = vmatmul.f32.gmra.mxu0 %v1291
      %v1371 = vpop.f32.mrf.mxu0
      %v1372 = vadd.f32 %v1254, %v1371
      %1373 = vmatmul.f32.gmra.mxu0 %v1294
      %v1374 = vpop.f32.mrf.mxu0
      %v1375 = vadd.f32 %v1254, %v1374
      %1376 = vmatmul.f32.gmra.mxu0 %v1297
      %v1377 = vpop.f32.mrf.mxu0
      %v1378 = vadd.f32 %v1254, %v1377
      %1379 = vmatmul.f32.gmra.mxu0 %v1300
      %v1380 = vpop.f32.mrf.mxu0
      %v1381 = vadd.f32 %v1254, %v1380
      %1382 = vmatmul.f32.gmra.mxu0 %v1303
      %v1383 = vpop.f32.mrf.mxu0
      %v1384 = vadd.f32 %v1254, %v1383
      %1385 = vmatmul.f32.gmra.mxu0 %v1306
      %v1386 = vpop.f32.mrf.mxu0
      %v1387 = vadd.f32 %v1254, %v1386
      %1388 = vmatmul.f32.gmra.mxu0 %v1309
      %v1389 = vpop.f32.mrf.mxu0
      %v1390 = vadd.f32 %v1254, %v1389
      %1391 = vmatmul.f32.gmra.mxu0 %v1312
      %v1392 = vpop.f32.mrf.mxu0
      %v1393 = vadd.f32 %v1254, %v1392
      %1394 = vmatmul.f32.gmra.mxu0 %v1315
      %v1395 = vpop.f32.mrf.mxu0
      %v1396 = vadd.f32 %v1254, %v1395
      %1397 = vdwg.mxu0
      %v1398 = vmax.f32 %v1339, 0.0
      %v1399 = vmax.f32 %v1342, 0.0
      %v1400 = vmax.f32 %v1345, 0.0
      %v1401 = vmax.f32 %v1348, 0.0
      %v1402 = vmax.f32 %v1351, 0.0
      %v1403 = vmax.f32 %v1354, 0.0
      %v1404 = vmax.f32 %v1357, 0.0
      %v1405 = vmax.f32 %v1360, 0.0
      %v1406 = vmax.f32 %v1363, 0.0
      %v1407 = vmax.f32 %v1366, 0.0
      %v1408 = vmax.f32 %v1369, 0.0
      %v1409 = vmax.f32 %v1372, 0.0
      %v1410 = vmax.f32 %v1375, 0.0
      %v1411 = vmax.f32 %v1378, 0.0
      %v1412 = vmax.f32 %v1381, 0.0
      %v1413 = vmax.f32 %v1384, 0.0
      %v1414 = vmax.f32 %v1387, 0.0
      %v1415 = vmax.f32 %v1390, 0.0
      %v1416 = vmax.f32 %v1393, 0.0
      %v1417 = vmax.f32 %v1396, 0.0
      %1418 = vst.msk [vmem:[#allocation2 + $0x1] sm:$0xff] %vm1100, %v1398
      %1419 = vst.msk [vmem:[#allocation2 + $0x9] sm:$0xff] %vm1100, %v1399
      %1420 = vst.msk [vmem:[#allocation2 + $0x19] sm:$0xff] %vm1100, %v1400
      %1421 = vst.msk [vmem:[#allocation2 + $0x21] sm:$0xff] %vm1100, %v1401
      %1422 = vst.msk [vmem:[#allocation2 + $0x31] sm:$0xff] %vm1100, %v1402
      %1423 = vst.msk [vmem:[#allocation2 + $0x39] sm:$0xff] %vm1100, %v1403
      %1424 = vst.msk [vmem:[#allocation2 + $0x49] sm:$0xff] %vm1100, %v1404
      %1425 = vst.msk [vmem:[#allocation2 + $0x51] sm:$0xff] %vm1100, %v1405
      %1426 = vst.msk [vmem:[#allocation2 + $0x61] sm:$0xff] %vm1100, %v1406
      %1427 = vst.msk [vmem:[#allocation2 + $0x69] sm:$0xff] %vm1100, %v1407
      %1428 = vst.msk [vmem:[#allocation2 + $0x79] sm:$0xff] %vm1100, %v1408
      %1429 = vst.msk [vmem:[#allocation2 + $0x81] sm:$0xff] %vm1100, %v1409
      %1430 = vst.msk [vmem:[#allocation2 + $0x91] sm:$0xff] %vm1100, %v1410
      %1431 = vst.msk [vmem:[#allocation2 + $0x99] sm:$0xff] %vm1100, %v1411
      %1432 = vst.msk [vmem:[#allocation2 + $0xa9] sm:$0xff] %vm1100, %v1412
      %1433 = vst.msk [vmem:[#allocation2 + $0xb1] sm:$0xff] %vm1100, %v1413
      %1434 = vst.msk [vmem:[#allocation2 + $0xc1] sm:$0xff] %vm1100, %v1414
      %1435 = vst.msk [vmem:[#allocation2 + $0xc9] sm:$0xff] %vm1100, %v1415
      %1436 = vst.msk [vmem:[#allocation2 + $0xd9] sm:$0xff] %vm1100, %v1416
      %1437 = vst.msk [vmem:[#allocation2 + $0xe1] sm:$0xff] %vm1100, %v1417
      %vm1438 = vcmask 57344
      %1439 = vst.msk [vmem:[#allocation2] sm:$0x1] %vm1438, 0.0
      %1440 = vst.msk [vmem:[#allocation2 + $0x18] sm:$0x1] %vm1438, 0.0
      %1441 = vst.msk [vmem:[#allocation2 + $0x30] sm:$0x1] %vm1438, 0.0
      %1442 = vst.msk [vmem:[#allocation2 + $0x48] sm:$0x1] %vm1438, 0.0
      %1443 = vst.msk [vmem:[#allocation2 + $0x60] sm:$0x1] %vm1438, 0.0
      %1444 = vst.msk [vmem:[#allocation2 + $0x78] sm:$0x1] %vm1438, 0.0
      %1445 = vst.msk [vmem:[#allocation2 + $0x90] sm:$0x1] %vm1438, 0.0
      %1446 = vst.msk [vmem:[#allocation2 + $0xa8] sm:$0x1] %vm1438, 0.0
      %1447 = vst.msk [vmem:[#allocation2 + $0xc0] sm:$0x1] %vm1438, 0.0
      %1448 = vst.msk [vmem:[#allocation2 + $0xd8] sm:$0x1] %vm1438, 0.0
      %1449 = vst.msk [vmem:[#allocation2 + $0x11] sm:$0x1] %vm1438, 0.0
      %1450 = vst.msk [vmem:[#allocation2 + $0x29] sm:$0x1] %vm1438, 0.0
      %1451 = vst.msk [vmem:[#allocation2 + $0x41] sm:$0x1] %vm1438, 0.0
      %1452 = vst.msk [vmem:[#allocation2 + $0x59] sm:$0x1] %vm1438, 0.0
      %1453 = vst.msk [vmem:[#allocation2 + $0x71] sm:$0x1] %vm1438, 0.0
      %1454 = vst.msk [vmem:[#allocation2 + $0x89] sm:$0x1] %vm1438, 0.0
      %1455 = vst.msk [vmem:[#allocation2 + $0xa1] sm:$0x1] %vm1438, 0.0
      %1456 = vst.msk [vmem:[#allocation2 + $0xb9] sm:$0x1] %vm1438, 0.0
      %1457 = vst.msk [vmem:[#allocation2 + $0xd1] sm:$0x1] %vm1438, 0.0
      %1458 = vst.msk [vmem:[#allocation2 + $0xe9] sm:$0x1] %vm1438, 0.0
      %p1459 = scmp.eq.s32.totalorder %s21, 0
      // Predicated region
      $region41: #{tpu_custom_call.1} parent=39 // pred_check
        %p1460 = pneg %p1459
      $region42: #{tpu_custom_call.1} parent=39 // pred_check_branch
        %1462 = sbr.rel (%p1460) target = $region44
      $region43: #{tpu_custom_call.1} parent=39 // pred_region
        %1463 = vst.msk [vmem:[#allocation2] sm:$0xff] %vm1100, 0.0
        %1464 = vst.msk [vmem:[#allocation2 + $0x8] sm:$0xff] %vm1100, 0.0
        %vm1465 = vcmask 58368
        %1466 = vst.msk [vmem:[#allocation2 + $0x10] sm:$0x3] %vm1465, 0.0
      $region44: #{tpu_custom_call.1} parent=39 // pred_fallthru
        _
      %p1467 = scmp.eq.s32.totalorder %s21, 1
      // Predicated region
      $region45: #{tpu_custom_call.1} parent=39 // pred_check
        %p1468 = pneg %p1467
      $region46: #{tpu_custom_call.1} parent=39 // pred_check_branch
        %1470 = sbr.rel (%p1468) target = $region48
      $region47: #{tpu_custom_call.1} parent=39 // pred_region
        %s1471 = scalar_lea.vmem [#allocation2], 216
        %1472 = vst.msk [vmem:[%s1471] sm:$0xff] %vm1100, 0.0
        %1473 = vst.msk [vmem:[%s1471 + $0x8] sm:$0xff] %vm1100, 0.0
        %vm1474 = vcmask 58368
        %1475 = vst.msk [vmem:[%s1471 + $0x10] sm:$0x3] %vm1474, 0.0
      $region48: #{tpu_custom_call.1} parent=39 // pred_fallthru
        _
      %v1476 = vld [vmem:[#allocation2] sm:$0xff]
      %v1477 = vld [vmem:[#allocation2 + $0x8] sm:$0xff]
      %v1478 = vld [vmem:[#allocation2 + $0x18] sm:$0xff]
      %v1479 = vld [vmem:[#allocation2 + $0x20] sm:$0xff]
      %v1480 = vld [vmem:[#allocation2 + $0x30] sm:$0xff]
      %v1481 = vld [vmem:[#allocation2 + $0x38] sm:$0xff]
      %v1482 = vld [vmem:[#allocation2 + $0x48] sm:$0xff]
      %v1483 = vld [vmem:[#allocation2 + $0x50] sm:$0xff]
      %v1484 = vld [vmem:[#allocation2 + $0x60] sm:$0xff]
      %v1485 = vld [vmem:[#allocation2 + $0x68] sm:$0xff]
      %v1486 = vld [vmem:[#allocation2 + $0x78] sm:$0xff]
      %v1487 = vld [vmem:[#allocation2 + $0x80] sm:$0xff]
      %v1488 = vld [vmem:[#allocation2 + $0x90] sm:$0xff]
      %v1489 = vld [vmem:[#allocation2 + $0x98] sm:$0xff]
      %v1490 = vld [vmem:[#allocation2 + $0xa8] sm:$0xff]
      %v1491 = vld [vmem:[#allocation2 + $0xb0] sm:$0xff]
      %v1492 = vld [vmem:[#allocation2 + $0x1] sm:$0xff]
      %v1493 = vld [vmem:[#allocation2 + $0x9] sm:$0xff]
      %v1494 = vld [vmem:[#allocation2 + $0x19] sm:$0xff]
      %v1495 = vld [vmem:[#allocation2 + $0x21] sm:$0xff]
      %v1496 = vld [vmem:[#allocation2 + $0x31] sm:$0xff]
      %v1497 = vld [vmem:[#allocation2 + $0x39] sm:$0xff]
      %v1498 = vld [vmem:[#allocation2 + $0x49] sm:$0xff]
      %v1499 = vld [vmem:[#allocation2 + $0x51] sm:$0xff]
      %v1500 = vld [vmem:[#allocation2 + $0x61] sm:$0xff]
      %v1501 = vld [vmem:[#allocation2 + $0x69] sm:$0xff]
      %v1502 = vld [vmem:[#allocation2 + $0x79] sm:$0xff]
      %v1503 = vld [vmem:[#allocation2 + $0x81] sm:$0xff]
      %v1504 = vld [vmem:[#allocation2 + $0x91] sm:$0xff]
      %v1505 = vld [vmem:[#allocation2 + $0x99] sm:$0xff]
      %v1506 = vld [vmem:[#allocation2 + $0xa9] sm:$0xff]
      %v1507 = vld [vmem:[#allocation2 + $0xb1] sm:$0xff]
      %v1508 = vld [vmem:[#allocation2 + $0x2] sm:$0xff]
      %v1509 = vld [vmem:[#allocation2 + $0xa] sm:$0xff]
      %v1510 = vld [vmem:[#allocation2 + $0x1a] sm:$0xff]
      %v1511 = vld [vmem:[#allocation2 + $0x22] sm:$0xff]
      %v1512 = vld [vmem:[#allocation2 + $0x32] sm:$0xff]
      %v1513 = vld [vmem:[#allocation2 + $0x3a] sm:$0xff]
      %v1514 = vld [vmem:[#allocation2 + $0x4a] sm:$0xff]
      %v1515 = vld [vmem:[#allocation2 + $0x52] sm:$0xff]
      %v1516 = vld [vmem:[#allocation2 + $0x62] sm:$0xff]
      %v1517 = vld [vmem:[#allocation2 + $0x6a] sm:$0xff]
      %v1518 = vld [vmem:[#allocation2 + $0x7a] sm:$0xff]
      %v1519 = vld [vmem:[#allocation2 + $0x82] sm:$0xff]
      %v1520 = vld [vmem:[#allocation2 + $0x92] sm:$0xff]
      %v1521 = vld [vmem:[#allocation2 + $0x9a] sm:$0xff]
      %v1522 = vld [vmem:[#allocation2 + $0xaa] sm:$0xff]
      %v1523 = vld [vmem:[#allocation2 + $0xb2] sm:$0xff]
      %s1524 = scalar_lea.vmem [#allocation2], 24
      %v1525 = vld [vmem:[%s1524] sm:$0xff]
      %v1526 = vld [vmem:[%s1524 + $0x8] sm:$0xff]
      %v1527 = vld [vmem:[%s1524 + $0x18] sm:$0xff]
      %v1528 = vld [vmem:[%s1524 + $0x20] sm:$0xff]
      %v1529 = vld [vmem:[%s1524 + $0x30] sm:$0xff]
      %v1530 = vld [vmem:[%s1524 + $0x38] sm:$0xff]
      %v1531 = vld [vmem:[%s1524 + $0x48] sm:$0xff]
      %v1532 = vld [vmem:[%s1524 + $0x50] sm:$0xff]
      %v1533 = vld [vmem:[%s1524 + $0x60] sm:$0xff]
      %v1534 = vld [vmem:[%s1524 + $0x68] sm:$0xff]
      %v1535 = vld [vmem:[%s1524 + $0x78] sm:$0xff]
      %v1536 = vld [vmem:[%s1524 + $0x80] sm:$0xff]
      %v1537 = vld [vmem:[%s1524 + $0x90] sm:$0xff]
      %v1538 = vld [vmem:[%s1524 + $0x98] sm:$0xff]
      %v1539 = vld [vmem:[%s1524 + $0xa8] sm:$0xff]
      %v1540 = vld [vmem:[%s1524 + $0xb0] sm:$0xff]
      %v1541 = vld [vmem:[%s1524 + $0x1] sm:$0xff]
      %v1542 = vld [vmem:[%s1524 + $0x9] sm:$0xff]
      %v1543 = vld [vmem:[%s1524 + $0x19] sm:$0xff]
      %v1544 = vld [vmem:[%s1524 + $0x21] sm:$0xff]
      %v1545 = vld [vmem:[%s1524 + $0x31] sm:$0xff]
      %v1546 = vld [vmem:[%s1524 + $0x39] sm:$0xff]
      %v1547 = vld [vmem:[%s1524 + $0x49] sm:$0xff]
      %v1548 = vld [vmem:[%s1524 + $0x51] sm:$0xff]
      %v1549 = vld [vmem:[%s1524 + $0x61] sm:$0xff]
      %v1550 = vld [vmem:[%s1524 + $0x69] sm:$0xff]
      %v1551 = vld [vmem:[%s1524 + $0x79] sm:$0xff]
      %v1552 = vld [vmem:[%s1524 + $0x81] sm:$0xff]
      %v1553 = vld [vmem:[%s1524 + $0x91] sm:$0xff]
      %v1554 = vld [vmem:[%s1524 + $0x99] sm:$0xff]
      %v1555 = vld [vmem:[%s1524 + $0xa9] sm:$0xff]
      %v1556 = vld [vmem:[%s1524 + $0xb1] sm:$0xff]
      %v1557 = vld [vmem:[%s1524 + $0x2] sm:$0xff]
      %v1558 = vld [vmem:[%s1524 + $0xa] sm:$0xff]
      %v1559 = vld [vmem:[%s1524 + $0x1a] sm:$0xff]
      %v1560 = vld [vmem:[%s1524 + $0x22] sm:$0xff]
      %v1561 = vld [vmem:[%s1524 + $0x32] sm:$0xff]
      %v1562 = vld [vmem:[%s1524 + $0x3a] sm:$0xff]
      %v1563 = vld [vmem:[%s1524 + $0x4a] sm:$0xff]
      %v1564 = vld [vmem:[%s1524 + $0x52] sm:$0xff]
      %v1565 = vld [vmem:[%s1524 + $0x62] sm:$0xff]
      %v1566 = vld [vmem:[%s1524 + $0x6a] sm:$0xff]
      %v1567 = vld [vmem:[%s1524 + $0x7a] sm:$0xff]
      %v1568 = vld [vmem:[%s1524 + $0x82] sm:$0xff]
      %v1569 = vld [vmem:[%s1524 + $0x92] sm:$0xff]
      %v1570 = vld [vmem:[%s1524 + $0x9a] sm:$0xff]
      %v1571 = vld [vmem:[%s1524 + $0xaa] sm:$0xff]
      %v1572 = vld [vmem:[%s1524 + $0xb2] sm:$0xff]
      %s1573 = scalar_lea.vmem [#allocation2], 48
      %v1574 = vld [vmem:[%s1573] sm:$0xff]
      %v1575 = vld [vmem:[%s1573 + $0x8] sm:$0xff]
      %v1576 = vld [vmem:[%s1573 + $0x18] sm:$0xff]
      %v1577 = vld [vmem:[%s1573 + $0x20] sm:$0xff]
      %v1578 = vld [vmem:[%s1573 + $0x30] sm:$0xff]
      %v1579 = vld [vmem:[%s1573 + $0x38] sm:$0xff]
      %v1580 = vld [vmem:[%s1573 + $0x48] sm:$0xff]
      %v1581 = vld [vmem:[%s1573 + $0x50] sm:$0xff]
      %v1582 = vld [vmem:[%s1573 + $0x60] sm:$0xff]
      %v1583 = vld [vmem:[%s1573 + $0x68] sm:$0xff]
      %v1584 = vld [vmem:[%s1573 + $0x78] sm:$0xff]
      %v1585 = vld [vmem:[%s1573 + $0x80] sm:$0xff]
      %v1586 = vld [vmem:[%s1573 + $0x90] sm:$0xff]
      %v1587 = vld [vmem:[%s1573 + $0x98] sm:$0xff]
      %v1588 = vld [vmem:[%s1573 + $0xa8] sm:$0xff]
      %v1589 = vld [vmem:[%s1573 + $0xb0] sm:$0xff]
      %v1590 = vld [vmem:[%s1573 + $0x1] sm:$0xff]
      %v1591 = vld [vmem:[%s1573 + $0x9] sm:$0xff]
      %v1592 = vld [vmem:[%s1573 + $0x19] sm:$0xff]
      %v1593 = vld [vmem:[%s1573 + $0x21] sm:$0xff]
      %v1594 = vld [vmem:[%s1573 + $0x31] sm:$0xff]
      %v1595 = vld [vmem:[%s1573 + $0x39] sm:$0xff]
      %v1596 = vld [vmem:[%s1573 + $0x49] sm:$0xff]
      %v1597 = vld [vmem:[%s1573 + $0x51] sm:$0xff]
      %v1598 = vld [vmem:[%s1573 + $0x61] sm:$0xff]
      %v1599 = vld [vmem:[%s1573 + $0x69] sm:$0xff]
      %v1600 = vld [vmem:[%s1573 + $0x79] sm:$0xff]
      %v1601 = vld [vmem:[%s1573 + $0x81] sm:$0xff]
      %v1602 = vld [vmem:[%s1573 + $0x91] sm:$0xff]
      %v1603 = vld [vmem:[%s1573 + $0x99] sm:$0xff]
      %v1604 = vld [vmem:[%s1573 + $0xa9] sm:$0xff]
      %v1605 = vld [vmem:[%s1573 + $0xb1] sm:$0xff]
      %v1606 = vld [vmem:[%s1573 + $0x2] sm:$0xff]
      %v1607 = vld [vmem:[%s1573 + $0xa] sm:$0xff]
      %v1608 = vld [vmem:[%s1573 + $0x1a] sm:$0xff]
      %v1609 = vld [vmem:[%s1573 + $0x22] sm:$0xff]
      %v1610 = vld [vmem:[%s1573 + $0x32] sm:$0xff]
      %v1611 = vld [vmem:[%s1573 + $0x3a] sm:$0xff]
      %v1612 = vld [vmem:[%s1573 + $0x4a] sm:$0xff]
      %v1613 = vld [vmem:[%s1573 + $0x52] sm:$0xff]
      %v1614 = vld [vmem:[%s1573 + $0x62] sm:$0xff]
      %v1615 = vld [vmem:[%s1573 + $0x6a] sm:$0xff]
      %v1616 = vld [vmem:[%s1573 + $0x7a] sm:$0xff]
      %v1617 = vld [vmem:[%s1573 + $0x82] sm:$0xff]
      %v1618 = vld [vmem:[%s1573 + $0x92] sm:$0xff]
      %v1619 = vld [vmem:[%s1573 + $0x9a] sm:$0xff]
      %v1620 = vld [vmem:[%s1573 + $0xaa] sm:$0xff]
      %v1621 = vld [vmem:[%s1573 + $0xb2] sm:$0xff]
      %1638 = vrot.lane.b32.xlu0 %v1492, 8
      %v1639 = vpop.permute.xlu0 %1638
      %1640 = vrot.lane.b32.xlu0 %v1493, 8
      %v1641 = vpop.permute.xlu0 %1640
      %1642 = vrot.lane.b32.xlu0 %v1494, 8
      %v1643 = vpop.permute.xlu0 %1642
      %1644 = vrot.lane.b32.xlu0 %v1495, 8
      %v1645 = vpop.permute.xlu0 %1644
      %1646 = vrot.lane.b32.xlu0 %v1496, 8
      %v1647 = vpop.permute.xlu0 %1646
      %1648 = vrot.lane.b32.xlu0 %v1497, 8
      %v1649 = vpop.permute.xlu0 %1648
      %1650 = vrot.lane.b32.xlu0 %v1498, 8
      %v1651 = vpop.permute.xlu0 %1650
      %1652 = vrot.lane.b32.xlu0 %v1499, 8
      %v1653 = vpop.permute.xlu0 %1652
      %1654 = vrot.lane.b32.xlu0 %v1500, 8
      %v1655 = vpop.permute.xlu0 %1654
      %1656 = vrot.lane.b32.xlu0 %v1501, 8
      %v1657 = vpop.permute.xlu0 %1656
      %1658 = vrot.lane.b32.xlu0 %v1502, 8
      %v1659 = vpop.permute.xlu0 %1658
      %1660 = vrot.lane.b32.xlu0 %v1503, 8
      %v1661 = vpop.permute.xlu0 %1660
      %1662 = vrot.lane.b32.xlu0 %v1504, 8
      %v1663 = vpop.permute.xlu0 %1662
      %1664 = vrot.lane.b32.xlu0 %v1505, 8
      %v1665 = vpop.permute.xlu0 %1664
      %1666 = vrot.lane.b32.xlu0 %v1506, 8
      %v1667 = vpop.permute.xlu0 %1666
      %1668 = vrot.lane.b32.xlu0 %v1507, 8
      %v1669 = vpop.permute.xlu0 %1668
      %1702 = vrot.lane.b32.xlu0 %v1508, 16
      %v1703 = vpop.permute.xlu0 %1702
      %1704 = vrot.lane.b32.xlu0 %v1509, 16
      %v1705 = vpop.permute.xlu0 %1704
      %1706 = vrot.lane.b32.xlu0 %v1510, 16
      %v1707 = vpop.permute.xlu0 %1706
      %1708 = vrot.lane.b32.xlu0 %v1511, 16
      %v1709 = vpop.permute.xlu0 %1708
      %1710 = vrot.lane.b32.xlu0 %v1512, 16
      %v1711 = vpop.permute.xlu0 %1710
      %1712 = vrot.lane.b32.xlu0 %v1513, 16
      %v1713 = vpop.permute.xlu0 %1712
      %1714 = vrot.lane.b32.xlu0 %v1514, 16
      %v1715 = vpop.permute.xlu0 %1714
      %1716 = vrot.lane.b32.xlu0 %v1515, 16
      %v1717 = vpop.permute.xlu0 %1716
      %1718 = vrot.lane.b32.xlu0 %v1516, 16
      %v1719 = vpop.permute.xlu0 %1718
      %1720 = vrot.lane.b32.xlu0 %v1517, 16
      %v1721 = vpop.permute.xlu0 %1720
      %1722 = vrot.lane.b32.xlu0 %v1518, 16
      %v1723 = vpop.permute.xlu0 %1722
      %1724 = vrot.lane.b32.xlu0 %v1519, 16
      %v1725 = vpop.permute.xlu0 %1724
      %1726 = vrot.lane.b32.xlu0 %v1520, 16
      %v1727 = vpop.permute.xlu0 %1726
      %1728 = vrot.lane.b32.xlu0 %v1521, 16
      %v1729 = vpop.permute.xlu0 %1728
      %1730 = vrot.lane.b32.xlu0 %v1522, 16
      %v1731 = vpop.permute.xlu0 %1730
      %1732 = vrot.lane.b32.xlu0 %v1523, 16
      %v1733 = vpop.permute.xlu0 %1732
      %1766 = vrot.lane.b32.xlu0 %v1525, 24
      %v1767 = vpop.permute.xlu0 %1766
      %1768 = vrot.lane.b32.xlu0 %v1526, 24
      %v1769 = vpop.permute.xlu0 %1768
      %1770 = vrot.lane.b32.xlu0 %v1527, 24
      %v1771 = vpop.permute.xlu0 %1770
      %1772 = vrot.lane.b32.xlu0 %v1528, 24
      %v1773 = vpop.permute.xlu0 %1772
      %1774 = vrot.lane.b32.xlu0 %v1529, 24
      %v1775 = vpop.permute.xlu0 %1774
      %1776 = vrot.lane.b32.xlu0 %v1530, 24
      %v1777 = vpop.permute.xlu0 %1776
      %1778 = vrot.lane.b32.xlu0 %v1531, 24
      %v1779 = vpop.permute.xlu0 %1778
      %1780 = vrot.lane.b32.xlu0 %v1532, 24
      %v1781 = vpop.permute.xlu0 %1780
      %1782 = vrot.lane.b32.xlu0 %v1533, 24
      %v1783 = vpop.permute.xlu0 %1782
      %1784 = vrot.lane.b32.xlu0 %v1534, 24
      %v1785 = vpop.permute.xlu0 %1784
      %1786 = vrot.lane.b32.xlu0 %v1535, 24
      %v1787 = vpop.permute.xlu0 %1786
      %1788 = vrot.lane.b32.xlu0 %v1536, 24
      %v1789 = vpop.permute.xlu0 %1788
      %1790 = vrot.lane.b32.xlu0 %v1537, 24
      %v1791 = vpop.permute.xlu0 %1790
      %1792 = vrot.lane.b32.xlu0 %v1538, 24
      %v1793 = vpop.permute.xlu0 %1792
      %1794 = vrot.lane.b32.xlu0 %v1539, 24
      %v1795 = vpop.permute.xlu0 %1794
      %1796 = vrot.lane.b32.xlu0 %v1540, 24
      %v1797 = vpop.permute.xlu0 %1796
      %1830 = vrot.lane.b32.xlu0 %v1541, 32
      %v1831 = vpop.permute.xlu0 %1830
      %1832 = vrot.lane.b32.xlu0 %v1542, 32
      %v1833 = vpop.permute.xlu0 %1832
      %1834 = vrot.lane.b32.xlu0 %v1543, 32
      %v1835 = vpop.permute.xlu0 %1834
      %1836 = vrot.lane.b32.xlu0 %v1544, 32
      %v1837 = vpop.permute.xlu0 %1836
      %1838 = vrot.lane.b32.xlu0 %v1545, 32
      %v1839 = vpop.permute.xlu0 %1838
      %1840 = vrot.lane.b32.xlu0 %v1546, 32
      %v1841 = vpop.permute.xlu0 %1840
      %1842 = vrot.lane.b32.xlu0 %v1547, 32
      %v1843 = vpop.permute.xlu0 %1842
      %1844 = vrot.lane.b32.xlu0 %v1548, 32
      %v1845 = vpop.permute.xlu0 %1844
      %1846 = vrot.lane.b32.xlu0 %v1549, 32
      %v1847 = vpop.permute.xlu0 %1846
      %1848 = vrot.lane.b32.xlu0 %v1550, 32
      %v1849 = vpop.permute.xlu0 %1848
      %1850 = vrot.lane.b32.xlu0 %v1551, 32
      %v1851 = vpop.permute.xlu0 %1850
      %1852 = vrot.lane.b32.xlu0 %v1552, 32
      %v1853 = vpop.permute.xlu0 %1852
      %1854 = vrot.lane.b32.xlu0 %v1553, 32
      %v1855 = vpop.permute.xlu0 %1854
      %1856 = vrot.lane.b32.xlu0 %v1554, 32
      %v1857 = vpop.permute.xlu0 %1856
      %1858 = vrot.lane.b32.xlu0 %v1555, 32
      %v1859 = vpop.permute.xlu0 %1858
      %1860 = vrot.lane.b32.xlu0 %v1556, 32
      %v1861 = vpop.permute.xlu0 %1860
      %1894 = vrot.lane.b32.xlu0 %v1557, 40
      %v1895 = vpop.permute.xlu0 %1894
      %1896 = vrot.lane.b32.xlu0 %v1558, 40
      %v1897 = vpop.permute.xlu0 %1896
      %1898 = vrot.lane.b32.xlu0 %v1559, 40
      %v1899 = vpop.permute.xlu0 %1898
      %1900 = vrot.lane.b32.xlu0 %v1560, 40
      %v1901 = vpop.permute.xlu0 %1900
      %1902 = vrot.lane.b32.xlu0 %v1561, 40
      %v1903 = vpop.permute.xlu0 %1902
      %1904 = vrot.lane.b32.xlu0 %v1562, 40
      %v1905 = vpop.permute.xlu0 %1904
      %1906 = vrot.lane.b32.xlu0 %v1563, 40
      %v1907 = vpop.permute.xlu0 %1906
      %1908 = vrot.lane.b32.xlu0 %v1564, 40
      %v1909 = vpop.permute.xlu0 %1908
      %1910 = vrot.lane.b32.xlu0 %v1565, 40
      %v1911 = vpop.permute.xlu0 %1910
      %1912 = vrot.lane.b32.xlu0 %v1566, 40
      %v1913 = vpop.permute.xlu0 %1912
      %1914 = vrot.lane.b32.xlu0 %v1567, 40
      %v1915 = vpop.permute.xlu0 %1914
      %1916 = vrot.lane.b32.xlu0 %v1568, 40
      %v1917 = vpop.permute.xlu0 %1916
      %1918 = vrot.lane.b32.xlu0 %v1569, 40
      %v1919 = vpop.permute.xlu0 %1918
      %1920 = vrot.lane.b32.xlu0 %v1570, 40
      %v1921 = vpop.permute.xlu0 %1920
      %1922 = vrot.lane.b32.xlu0 %v1571, 40
      %v1923 = vpop.permute.xlu0 %1922
      %1924 = vrot.lane.b32.xlu0 %v1572, 40
      %v1925 = vpop.permute.xlu0 %1924
      %1958 = vrot.lane.b32.xlu0 %v1574, 48
      %v1959 = vpop.permute.xlu0 %1958
      %1960 = vrot.lane.b32.xlu0 %v1575, 48
      %v1961 = vpop.permute.xlu0 %1960
      %1962 = vrot.lane.b32.xlu0 %v1576, 48
      %v1963 = vpop.permute.xlu0 %1962
      %1964 = vrot.lane.b32.xlu0 %v1577, 48
      %v1965 = vpop.permute.xlu0 %1964
      %1966 = vrot.lane.b32.xlu0 %v1578, 48
      %v1967 = vpop.permute.xlu0 %1966
      %1968 = vrot.lane.b32.xlu0 %v1579, 48
      %v1969 = vpop.permute.xlu0 %1968
      %1970 = vrot.lane.b32.xlu0 %v1580, 48
      %v1971 = vpop.permute.xlu0 %1970
      %1972 = vrot.lane.b32.xlu0 %v1581, 48
      %v1973 = vpop.permute.xlu0 %1972
      %1974 = vrot.lane.b32.xlu0 %v1582, 48
      %v1975 = vpop.permute.xlu0 %1974
      %1976 = vrot.lane.b32.xlu0 %v1583, 48
      %v1977 = vpop.permute.xlu0 %1976
      %1978 = vrot.lane.b32.xlu0 %v1584, 48
      %v1979 = vpop.permute.xlu0 %1978
      %1980 = vrot.lane.b32.xlu0 %v1585, 48
      %v1981 = vpop.permute.xlu0 %1980
      %1982 = vrot.lane.b32.xlu0 %v1586, 48
      %v1983 = vpop.permute.xlu0 %1982
      %1984 = vrot.lane.b32.xlu0 %v1587, 48
      %v1985 = vpop.permute.xlu0 %1984
      %1986 = vrot.lane.b32.xlu0 %v1588, 48
      %v1987 = vpop.permute.xlu0 %1986
      %1988 = vrot.lane.b32.xlu0 %v1589, 48
      %v1989 = vpop.permute.xlu0 %1988
      %2022 = vrot.lane.b32.xlu0 %v1590, 56
      %v2023 = vpop.permute.xlu0 %2022
      %2024 = vrot.lane.b32.xlu0 %v1591, 56
      %v2025 = vpop.permute.xlu0 %2024
      %2026 = vrot.lane.b32.xlu0 %v1592, 56
      %v2027 = vpop.permute.xlu0 %2026
      %2028 = vrot.lane.b32.xlu0 %v1593, 56
      %v2029 = vpop.permute.xlu0 %2028
      %2030 = vrot.lane.b32.xlu0 %v1594, 56
      %v2031 = vpop.permute.xlu0 %2030
      %2032 = vrot.lane.b32.xlu0 %v1595, 56
      %v2033 = vpop.permute.xlu0 %2032
      %2034 = vrot.lane.b32.xlu0 %v1596, 56
      %v2035 = vpop.permute.xlu0 %2034
      %2036 = vrot.lane.b32.xlu0 %v1597, 56
      %v2037 = vpop.permute.xlu0 %2036
      %2038 = vrot.lane.b32.xlu0 %v1598, 56
      %v2039 = vpop.permute.xlu0 %2038
      %2040 = vrot.lane.b32.xlu0 %v1599, 56
      %v2041 = vpop.permute.xlu0 %2040
      %2042 = vrot.lane.b32.xlu0 %v1600, 56
      %v2043 = vpop.permute.xlu0 %2042
      %2044 = vrot.lane.b32.xlu0 %v1601, 56
      %v2045 = vpop.permute.xlu0 %2044
      %2046 = vrot.lane.b32.xlu0 %v1602, 56
      %v2047 = vpop.permute.xlu0 %2046
      %2048 = vrot.lane.b32.xlu0 %v1603, 56
      %v2049 = vpop.permute.xlu0 %2048
      %2050 = vrot.lane.b32.xlu0 %v1604, 56
      %v2051 = vpop.permute.xlu0 %2050
      %2052 = vrot.lane.b32.xlu0 %v1605, 56
      %v2053 = vpop.permute.xlu0 %2052
      %2086 = vrot.lane.b32.xlu0 %v1606, 64
      %v2087 = vpop.permute.xlu0 %2086
      %2088 = vrot.lane.b32.xlu0 %v1607, 64
      %v2089 = vpop.permute.xlu0 %2088
      %2090 = vrot.lane.b32.xlu0 %v1608, 64
      %v2091 = vpop.permute.xlu0 %2090
      %2092 = vrot.lane.b32.xlu0 %v1609, 64
      %v2093 = vpop.permute.xlu0 %2092
      %2094 = vrot.lane.b32.xlu0 %v1610, 64
      %v2095 = vpop.permute.xlu0 %2094
      %2096 = vrot.lane.b32.xlu0 %v1611, 64
      %v2097 = vpop.permute.xlu0 %2096
      %2098 = vrot.lane.b32.xlu0 %v1612, 64
      %v2099 = vpop.permute.xlu0 %2098
      %2100 = vrot.lane.b32.xlu0 %v1613, 64
      %v2101 = vpop.permute.xlu0 %2100
      %2102 = vrot.lane.b32.xlu0 %v1614, 64
      %v2103 = vpop.permute.xlu0 %2102
      %2104 = vrot.lane.b32.xlu0 %v1615, 64
      %v2105 = vpop.permute.xlu0 %2104
      %2106 = vrot.lane.b32.xlu0 %v1616, 64
      %v2107 = vpop.permute.xlu0 %2106
      %2108 = vrot.lane.b32.xlu0 %v1617, 64
      %v2109 = vpop.permute.xlu0 %2108
      %2110 = vrot.lane.b32.xlu0 %v1618, 64
      %v2111 = vpop.permute.xlu0 %2110
      %2112 = vrot.lane.b32.xlu0 %v1619, 64
      %v2113 = vpop.permute.xlu0 %2112
      %2114 = vrot.lane.b32.xlu0 %v1620, 64
      %v2115 = vpop.permute.xlu0 %2114
      %2116 = vrot.lane.b32.xlu0 %v1621, 64
      %v2117 = vpop.permute.xlu0 %2116
      %v2134 = vsel %vm1100, %v1476, %v1639
      %v2135 = vsel %vm1100, %v1477, %v1641
      %v2136 = vsel %vm1100, %v1478, %v1643
      %v2137 = vsel %vm1100, %v1479, %v1645
      %v2138 = vsel %vm1100, %v1480, %v1647
      %v2139 = vsel %vm1100, %v1481, %v1649
      %v2140 = vsel %vm1100, %v1482, %v1651
      %v2141 = vsel %vm1100, %v1483, %v1653
      %v2142 = vsel %vm1100, %v1484, %v1655
      %v2143 = vsel %vm1100, %v1485, %v1657
      %v2144 = vsel %vm1100, %v1486, %v1659
      %v2145 = vsel %vm1100, %v1487, %v1661
      %v2146 = vsel %vm1100, %v1488, %v1663
      %v2147 = vsel %vm1100, %v1489, %v1665
      %v2148 = vsel %vm1100, %v1490, %v1667
      %v2149 = vsel %vm1100, %v1491, %v1669
      %v2150 = vsel %vm1142, %v2134, %v1703
      %v2151 = vsel %vm1142, %v2135, %v1705
      %v2152 = vsel %vm1142, %v2136, %v1707
      %v2153 = vsel %vm1142, %v2137, %v1709
      %v2154 = vsel %vm1142, %v2138, %v1711
      %v2155 = vsel %vm1142, %v2139, %v1713
      %v2156 = vsel %vm1142, %v2140, %v1715
      %v2157 = vsel %vm1142, %v2141, %v1717
      %v2158 = vsel %vm1142, %v2142, %v1719
      %v2159 = vsel %vm1142, %v2143, %v1721
      %v2160 = vsel %vm1142, %v2144, %v1723
      %v2161 = vsel %vm1142, %v2145, %v1725
      %v2162 = vsel %vm1142, %v2146, %v1727
      %v2163 = vsel %vm1142, %v2147, %v1729
      %v2164 = vsel %vm1142, %v2148, %v1731
      %v2165 = vsel %vm1142, %v2149, %v1733
      %v2166 = vsel %vm1184, %v2150, %v1767
      %v2167 = vsel %vm1184, %v2151, %v1769
      %v2168 = vsel %vm1184, %v2152, %v1771
      %v2169 = vsel %vm1184, %v2153, %v1773
      %v2170 = vsel %vm1184, %v2154, %v1775
      %v2171 = vsel %vm1184, %v2155, %v1777
      %v2172 = vsel %vm1184, %v2156, %v1779
      %v2173 = vsel %vm1184, %v2157, %v1781
      %v2174 = vsel %vm1184, %v2158, %v1783
      %v2175 = vsel %vm1184, %v2159, %v1785
      %v2176 = vsel %vm1184, %v2160, %v1787
      %v2177 = vsel %vm1184, %v2161, %v1789
      %v2178 = vsel %vm1184, %v2162, %v1791
      %v2179 = vsel %vm1184, %v2163, %v1793
      %v2180 = vsel %vm1184, %v2164, %v1795
      %v2181 = vsel %vm1184, %v2165, %v1797
      %v2182 = vsel %vm1226, %v2166, %v1831
      %v2183 = vsel %vm1226, %v2167, %v1833
      %v2184 = vsel %vm1226, %v2168, %v1835
      %v2185 = vsel %vm1226, %v2169, %v1837
      %v2186 = vsel %vm1226, %v2170, %v1839
      %v2187 = vsel %vm1226, %v2171, %v1841
      %v2188 = vsel %vm1226, %v2172, %v1843
      %v2189 = vsel %vm1226, %v2173, %v1845
      %v2190 = vsel %vm1226, %v2174, %v1847
      %v2191 = vsel %vm1226, %v2175, %v1849
      %v2192 = vsel %vm1226, %v2176, %v1851
      %v2193 = vsel %vm1226, %v2177, %v1853
      %v2194 = vsel %vm1226, %v2178, %v1855
      %v2195 = vsel %vm1226, %v2179, %v1857
      %v2196 = vsel %vm1226, %v2180, %v1859
      %v2197 = vsel %vm1226, %v2181, %v1861
      %vm2198 = vcmask 326656
      %v2199 = vsel %vm2198, %v2182, %v1895
      %v2200 = vsel %vm2198, %v2183, %v1897
      %v2201 = vsel %vm2198, %v2184, %v1899
      %v2202 = vsel %vm2198, %v2185, %v1901
      %v2203 = vsel %vm2198, %v2186, %v1903
      %v2204 = vsel %vm2198, %v2187, %v1905
      %v2205 = vsel %vm2198, %v2188, %v1907
      %v2206 = vsel %vm2198, %v2189, %v1909
      %v2207 = vsel %vm2198, %v2190, %v1911
      %v2208 = vsel %vm2198, %v2191, %v1913
      %v2209 = vsel %vm2198, %v2192, %v1915
      %v2210 = vsel %vm2198, %v2193, %v1917
      %v2211 = vsel %vm2198, %v2194, %v1919
      %v2212 = vsel %vm2198, %v2195, %v1921
      %v2213 = vsel %vm2198, %v2196, %v1923
      %v2214 = vsel %vm2198, %v2197, %v1925
      %vm2215 = vcmask 392192
      %v2216 = vsel %vm2215, %v2199, %v1959
      %v2217 = vsel %vm2215, %v2200, %v1961
      %v2218 = vsel %vm2215, %v2201, %v1963
      %v2219 = vsel %vm2215, %v2202, %v1965
      %v2220 = vsel %vm2215, %v2203, %v1967
      %v2221 = vsel %vm2215, %v2204, %v1969
      %v2222 = vsel %vm2215, %v2205, %v1971
      %v2223 = vsel %vm2215, %v2206, %v1973
      %v2224 = vsel %vm2215, %v2207, %v1975
      %v2225 = vsel %vm2215, %v2208, %v1977
      %v2226 = vsel %vm2215, %v2209, %v1979
      %v2227 = vsel %vm2215, %v2210, %v1981
      %v2228 = vsel %vm2215, %v2211, %v1983
      %v2229 = vsel %vm2215, %v2212, %v1985
      %v2230 = vsel %vm2215, %v2213, %v1987
      %v2231 = vsel %vm2215, %v2214, %v1989
      %vm2232 = vcmask 457728
      %v2233 = vsel %vm2232, %v2216, %v2023
      %v2234 = vsel %vm2232, %v2217, %v2025
      %v2235 = vsel %vm2232, %v2218, %v2027
      %v2236 = vsel %vm2232, %v2219, %v2029
      %v2237 = vsel %vm2232, %v2220, %v2031
      %v2238 = vsel %vm2232, %v2221, %v2033
      %v2239 = vsel %vm2232, %v2222, %v2035
      %v2240 = vsel %vm2232, %v2223, %v2037
      %v2241 = vsel %vm2232, %v2224, %v2039
      %v2242 = vsel %vm2232, %v2225, %v2041
      %v2243 = vsel %vm2232, %v2226, %v2043
      %v2244 = vsel %vm2232, %v2227, %v2045
      %v2245 = vsel %vm2232, %v2228, %v2047
      %v2246 = vsel %vm2232, %v2229, %v2049
      %v2247 = vsel %vm2232, %v2230, %v2051
      %v2248 = vsel %vm2232, %v2231, %v2053
      %vm2249 = vcmask 523264
      %v2250 = vsel %vm2249, %v2233, %v2087
      %v2251 = vsel %vm2249, %v2234, %v2089
      %v2252 = vsel %vm2249, %v2235, %v2091
      %v2253 = vsel %vm2249, %v2236, %v2093
      %v2254 = vsel %vm2249, %v2237, %v2095
      %v2255 = vsel %vm2249, %v2238, %v2097
      %v2256 = vsel %vm2249, %v2239, %v2099
      %v2257 = vsel %vm2249, %v2240, %v2101
      %v2258 = vsel %vm2249, %v2241, %v2103
      %v2259 = vsel %vm2249, %v2242, %v2105
      %v2260 = vsel %vm2249, %v2243, %v2107
      %v2261 = vsel %vm2249, %v2244, %v2109
      %v2262 = vsel %vm2249, %v2245, %v2111
      %v2263 = vsel %vm2249, %v2246, %v2113
      %v2264 = vsel %vm2249, %v2247, %v2115
      %v2265 = vsel %vm2249, %v2248, %v2117
      %v2266 = vld [vmem:[%s3] sm:$0xff]
      %v2267 = vld [vmem:[%s3 + $0x8] sm:$0xff]
      %v2268 = vld [vmem:[%s3 + $0x10] sm:$0xff]
      %v2269 = vld [vmem:[%s3 + $0x18] sm:$0xff]
      %v2270 = vld [vmem:[%s3 + $0x20] sm:$0xff]
      %v2271 = vld [vmem:[%s3 + $0x28] sm:$0xff]
      %v2272 = vld [vmem:[%s3 + $0x30] sm:$0xff]
      %v2273 = vld [vmem:[%s3 + $0x38] sm:$0xff]
      %v2274 = vld [vmem:[%s3 + $0x40] sm:$0xff]
      %v2275 = vld [vmem:[%s4] sm:$0x1]
      %v2277 = vperm.slane %v2275, 0
      %vm2279 = vcmask 588800
      %v2281 = vsel %vm2279, %v2250, 0
      %v2284 = vsel %vm2279, %v2251, 0
      %v2287 = vsel %vm2279, %v2252, 0
      %v2290 = vsel %vm2279, %v2253, 0
      %v2293 = vsel %vm2279, %v2254, 0
      %v2296 = vsel %vm2279, %v2255, 0
      %v2299 = vsel %vm2279, %v2256, 0
      %v2302 = vsel %vm2279, %v2257, 0
      %v2305 = vsel %vm2279, %v2258, 0
      %v2308 = vsel %vm2279, %v2259, 0
      %v2311 = vsel %vm2279, %v2260, 0
      %v2314 = vsel %vm2279, %v2261, 0
      %v2317 = vsel %vm2279, %v2262, 0
      %v2320 = vsel %vm2279, %v2263, 0
      %v2323 = vsel %vm2279, %v2264, 0
      %v2326 = vsel %vm2279, %v2265, 0
      %2328 = vmatpush.msra.mxu0 0.0
      %2329 = vmatpush.msra.mxu0 0.0
      %2330 = vmatpush.msra.mxu0 0.0
      %2331 = vmatpush.msra.mxu0 0.0
      %2332 = vmatpush.msra.mxu0 0.0
      %2333 = vmatpush.msra.mxu0 0.0
      %2334 = vmatpush.msra.mxu0 0.0
      %2335 = vmatpush.msra.mxu0 %v2274
      %2336 = vmatpush.msra.mxu0 %v2273
      %2337 = vmatpush.msra.mxu0 %v2272
      %2338 = vmatpush.msra.mxu0 %v2271
      %2339 = vmatpush.msra.mxu0 %v2270
      %2340 = vmatpush.msra.mxu0 %v2269
      %2341 = vmatpush.msra.mxu0 %v2268
      %2342 = vmatpush.msra.mxu0 %v2267
      %2343 = vmatpush.msra.mxu0 %v2266
      %2344 = vmatmul.f32.gmra.mxu0 %v2281
      %v2345 = vpop.f32.mrf.mxu0
      %v2346 = vadd.f32 %v2277, %v2345
      %2347 = vmatmul.f32.gmra.mxu0 %v2284
      %v2348 = vpop.f32.mrf.mxu0
      %v2349 = vadd.f32 %v2277, %v2348
      %2350 = vmatmul.f32.gmra.mxu0 %v2287
      %v2351 = vpop.f32.mrf.mxu0
      %v2352 = vadd.f32 %v2277, %v2351
      %2353 = vmatmul.f32.gmra.mxu0 %v2290
      %v2354 = vpop.f32.mrf.mxu0
      %v2355 = vadd.f32 %v2277, %v2354
      %2356 = vmatmul.f32.gmra.mxu0 %v2293
      %v2357 = vpop.f32.mrf.mxu0
      %v2358 = vadd.f32 %v2277, %v2357
      %2359 = vmatmul.f32.gmra.mxu0 %v2296
      %v2360 = vpop.f32.mrf.mxu0
      %v2361 = vadd.f32 %v2277, %v2360
      %2362 = vmatmul.f32.gmra.mxu0 %v2299
      %v2363 = vpop.f32.mrf.mxu0
      %v2364 = vadd.f32 %v2277, %v2363
      %2365 = vmatmul.f32.gmra.mxu0 %v2302
      %v2366 = vpop.f32.mrf.mxu0
      %v2367 = vadd.f32 %v2277, %v2366
      %2368 = vmatmul.f32.gmra.mxu0 %v2305
      %v2369 = vpop.f32.mrf.mxu0
      %v2370 = vadd.f32 %v2277, %v2369
      %2371 = vmatmul.f32.gmra.mxu0 %v2308
      %v2372 = vpop.f32.mrf.mxu0
      %v2373 = vadd.f32 %v2277, %v2372
      %2374 = vmatmul.f32.gmra.mxu0 %v2311
      %v2375 = vpop.f32.mrf.mxu0
      %v2376 = vadd.f32 %v2277, %v2375
      %2377 = vmatmul.f32.gmra.mxu0 %v2314
      %v2378 = vpop.f32.mrf.mxu0
      %v2379 = vadd.f32 %v2277, %v2378
      %2380 = vmatmul.f32.gmra.mxu0 %v2317
      %v2381 = vpop.f32.mrf.mxu0
      %v2382 = vadd.f32 %v2277, %v2381
      %2383 = vmatmul.f32.gmra.mxu0 %v2320
      %v2384 = vpop.f32.mrf.mxu0
      %v2385 = vadd.f32 %v2277, %v2384
      %2386 = vmatmul.f32.gmra.mxu0 %v2323
      %v2387 = vpop.f32.mrf.mxu0
      %v2388 = vadd.f32 %v2277, %v2387
      %2389 = vmatmul.f32.gmra.mxu0 %v2326
      %v2390 = vpop.f32.mrf.mxu0
      %v2391 = vadd.f32 %v2277, %v2390
      %2392 = vdwg.mxu0
      %v2393 = vmax.f32 %v2346, 0.0
      %v2394 = vmax.f32 %v2349, 0.0
      %v2395 = vmax.f32 %v2352, 0.0
      %v2396 = vmax.f32 %v2355, 0.0
      %v2397 = vmax.f32 %v2358, 0.0
      %v2398 = vmax.f32 %v2361, 0.0
      %v2399 = vmax.f32 %v2364, 0.0
      %v2400 = vmax.f32 %v2367, 0.0
      %v2401 = vmax.f32 %v2370, 0.0
      %v2402 = vmax.f32 %v2373, 0.0
      %v2403 = vmax.f32 %v2376, 0.0
      %v2404 = vmax.f32 %v2379, 0.0
      %v2405 = vmax.f32 %v2382, 0.0
      %v2406 = vmax.f32 %v2385, 0.0
      %v2407 = vmax.f32 %v2388, 0.0
      %v2408 = vmax.f32 %v2391, 0.0
      %2409 = vst.msk [vmem:[%s248] sm:$0xff] %vm1100, %v2393
      %2410 = vst.msk [vmem:[%s248 + $0x8] sm:$0xff] %vm1100, %v2394
      %2411 = vst.msk [vmem:[%s248 + $0x10] sm:$0xff] %vm1100, %v2395
      %2412 = vst.msk [vmem:[%s248 + $0x18] sm:$0xff] %vm1100, %v2396
      %2413 = vst.msk [vmem:[%s248 + $0x20] sm:$0xff] %vm1100, %v2397
      %2414 = vst.msk [vmem:[%s248 + $0x28] sm:$0xff] %vm1100, %v2398
      %2415 = vst.msk [vmem:[%s248 + $0x30] sm:$0xff] %vm1100, %v2399
      %2416 = vst.msk [vmem:[%s248 + $0x38] sm:$0xff] %vm1100, %v2400
      %2417 = vst.msk [vmem:[%s248 + $0x40] sm:$0xff] %vm1100, %v2401
      %2418 = vst.msk [vmem:[%s248 + $0x48] sm:$0xff] %vm1100, %v2402
      %2419 = vst.msk [vmem:[%s248 + $0x50] sm:$0xff] %vm1100, %v2403
      %2420 = vst.msk [vmem:[%s248 + $0x58] sm:$0xff] %vm1100, %v2404
      %2421 = vst.msk [vmem:[%s248 + $0x60] sm:$0xff] %vm1100, %v2405
      %2422 = vst.msk [vmem:[%s248 + $0x68] sm:$0xff] %vm1100, %v2406
      %2423 = vst.msk [vmem:[%s248 + $0x70] sm:$0xff] %vm1100, %v2407
      %2424 = vst.msk [vmem:[%s248 + $0x78] sm:$0xff] %vm1100, %v2408
      %s2425 = smul.u32 8, %s21
      %p2426 = scmp.lt.s32.totalorder %s20, 1
      %s2427 = scalar_select %p2426, %s20, 1
      %p2428 = scmp.lt.s32.totalorder %s2425, 15
      %s2429 = scalar_select %p2428, %s2425, 15
      %s2430 = smul.addr %s2429, 2
      %s2431 = smul.addr %s2427, 32
      %s2432 = sadd.s32 %s2430, %s2431
      %s2433 = smul.addr %s2432, 8
      %s2434 = scalar_lea.vmem %s5, %s2433
      // Predicated region
      $region49: #{tpu_custom_call.1} parent=39 // pred_check
        %p2435 = pneg %p158
      $region50: #{tpu_custom_call.1} parent=39 // pred_check_branch
        %2437 = sbr.rel (%p2435) target = $region52
      $region51: #{tpu_custom_call.1} parent=39 // pred_region
        %s2438 = smul.u32 8, %s21
      $region52: #{tpu_custom_call.1} parent=39 // pred_fallthru
        _
    $region40: #{tpu_custom_call.1} parent=5 // pred_fallthru
      _
    %p2439 = scmp.le.s32.totalorder 2, %s11
    // Predicated region
    $region53: #{tpu_custom_call.1} parent=5 // pred_check
      %p2440 = pneg %p2439
    $region54: #{tpu_custom_call.1} parent=5 // pred_check_branch
      %2442 = sbr.rel (%p2440) target = $region56
    $region55: #{tpu_custom_call.1} parent=5 // pred_region
      %s2443 = ssub.s32 %s11, 2
      // Predicated region
      $region57: #{tpu_custom_call.1} parent=55 // pred_check
        %p2444 = pneg %p164
      $region58: #{tpu_custom_call.1} parent=55 // pred_check_branch
        %2446 = sbr.rel (%p2444) target = $region60
      $region59: #{tpu_custom_call.1} parent=55 // pred_region
        %s2447 = smul.u32 8, %s23
        %p2448 = scmp.lt.s32.totalorder %s22, 1
        %s2449 = scalar_select %p2448, %s22, 1
        %p2450 = scmp.lt.s32.totalorder %s2447, 15
        %s2451 = scalar_select %p2450, %s2447, 15
        %s2452 = smul.addr %s2451, 2
        %s2453 = smul.addr %s2449, 32
        %s2454 = sadd.s32 %s2452, %s2453
        %s2455 = smul.addr %s2454, 8
        %s2456 = scalar_lea.vmem %s5, %s2455
      $region60: #{tpu_custom_call.1} parent=55 // pred_fallthru
        _
    $region56: #{tpu_custom_call.1} parent=5 // pred_fallthru
      _
  $region6: #{tpu_custom_call.1} parent=0 // loop_footer
    %s15 = sadd.s32 1, %s11
  $region7: #{tpu_custom_call.1} parent=0 // loop_footer_branch
    %10 = sbr.rel target = $region3
  $region8: #{tpu_custom_call.1} parent=0 // loop_exit
    _

</llo_original>
